<compile_context>
chip_gen: v7x
topology: tpu7x:2x2x1
jax: 0.10.0
libtpu: 0.0.40
codegen_flags: <defaults>
</compile_context>

<pallas_src>
import jax
import jax.numpy as jnp
from jax import lax
from jax.experimental import pallas as pl
from jax.experimental.pallas import tpu as pltpu

N_EMBED = 32  # n_embed_fea in the PyTorch module


def _round_up(x, m):
    return ((x + m - 1) // m) * m


def _tpu_generation_info():
    """(vmem_capacity_bytes, mxu_edge, two_tensorcores) with safe fallbacks."""
    kind = ""
    try:
        kind = jax.devices()[0].device_kind.lower()
    except Exception:
        pass
    try:
        vmem = int(pltpu.get_tpu_info().vmem_capacity_bytes)
    except Exception:
        if "7" in kind:
            vmem = 64 << 20
        elif ("v5" in kind) or ("v6" in kind):
            vmem = 128 << 20
        else:
            vmem = 16 << 20            # conservative for older generations
    mxu_edge = 128 if "v5" in kind else 256
    two_tc = "7" in kind               # v7x: 2 TensorCores per chip
    return vmem, mxu_edge, two_tc


def _choose_tiling(B, N, f_in, vmem_limit_bytes, mxu_edge, two_tc):
    """Pick (G graphs per grid step, k graphs per block-diagonal MXU group)."""
    # k: pack k adjacency blocks on the diagonal so k*N ~= the MXU edge.
    k = max(1, min(B, max(1, mxu_edge // N)))

    # Padding-aware per-graph VMEM model:
    #   bf16 input blocks pad their last two dims to (16, 128) tiles (x2 for
    #   double buffering); live f32 activation slabs pad 32/96 lanes -> 128.
    a_tile = _round_up(N, 16) * _round_up(N, 128) * 2            # bf16 A block
    xe_tile = _round_up(N, 16) * _round_up(f_in, 128) * 2        # bf16 [X|E]
    act = 6 * _round_up(N, 8) * 128 * 4                          # f32 slabs
    per_graph = 2 * (a_tile + xe_tile) + act
    fixed = 2 << 20   # bd scratch, weights, compiler-internal headroom

    g_max = max(k, min(256, (vmem_limit_bytes - fixed) // per_graph))
    g_max = max(k, (g_max // k) * k)

    nblk = -(-B // g_max)
    if two_tc and nblk < 2 and B > k:
        nblk = 2                       # keep both v7x TensorCores busy
    g = -(-B // nblk)
    g = max(k, _round_up(g, k))        # G is always a multiple of k
    return g, k


def mgcn_kernel(xe_ref, a_ref, w_in_ref, wn_cat_ref, w2_ref, w3_ref,
                bias32_ref, c2_ref, c3_ref, out_ref, bd_ref):
    f32, bf16 = jnp.float32, jnp.bfloat16
    G, N, f_in = xe_ref.shape
    kN = bd_ref.shape[0]
    k = kN // N
    ngrp = G // k

    # Packed biases [b_emb | b1 | b2 | c1]: one lane-dense (1, 128) load.
    bias32 = bias32_ref[...]
    b_emb = bias32[:, 0:32]
    b1 = bias32[:, 32:64]
    b2 = bias32[:, 64:96]
    c1 = bias32[:, 96:128]

    # Packed node-side 32-wide weights [wn1 | wn2 | w1].
    wn_cat = wn_cat_ref[...]
    wn1 = wn_cat[:, 0:32]
    wn2 = wn_cat[:, 32:64]
    w1 = wn_cat[:, 64:96]

    # One bf16 MXU push: [X|E] @ [[w_emb,0,0],[0,we1,we2]] -> [h_pre|m1|m2].
    xe2d = xe_ref[...].reshape(G * N, f_in)
    z = jnp.dot(xe2d, w_in_ref[...], preferred_element_type=f32)    # (G*N, 96)
    h = z[:, 0:32] + b_emb
    e_msg1 = z[:, 32:64] + b1
    e_msg2 = z[:, 64:96] + b2

    # gc1 node-side matmul on the full (G*N, 32) slab; bf16 operand for the
    # block-diagonal adjacency matmul (A is 0/1, so bf16 A is exact).
    hw1 = jnp.dot(h, wn1, preferred_element_type=f32).astype(bf16)

    # Zero the block-diagonal scratch once: only the diagonal N x N blocks are
    # (re)written below, so off-diagonal entries stay zero for every group.
    bd_ref[...] = jnp.zeros_like(bd_ref)

    pooled = []
    for g in range(ngrp):
        r0 = g * kN
        # Pack this group's k adjacency blocks onto the diagonal (static slices).
        for i in range(k):
            bd_ref[i * N:(i + 1) * N, i * N:(i + 1) * N] = a_ref[g * k + i]
        bd = bd_ref[...]

        # gc1: H = H + ReLU(A @ (H @ Wn1) + E @ We1 + b1)
        ah1 = jnp.dot(bd, hw1[r0:r0 + kN], preferred_element_type=f32)
        hg = h[r0:r0 + kN] + jnp.maximum(ah1 + e_msg1[r0:r0 + kN], 0.0)

        # gc2: H = H + ReLU(A @ (H @ Wn2) + E @ We2 + b2)
        hw2 = jnp.dot(hg, wn2, preferred_element_type=f32).astype(bf16)
        ah2 = jnp.dot(bd, hw2, preferred_element_type=f32)
        hg = hg + jnp.maximum(ah2 + e_msg2[r0:r0 + kN], 0.0)

        # Mean-pool over the (padded) node axis -> (k, 32).
        # TODO(synk): ragged per-graph node counts (data['N']) would need a
        #             node mask and per-graph divisor (scalar-prefetch them).
        pooled.append(jnp.mean(hg.reshape(k, N, N_EMBED), axis=1))

    p = pooled[0] if ngrp == 1 else jnp.concatenate(pooled, axis=0)   # (G, 32)

    # Head: Linear(32,32)+ReLU -> Linear(32,n_hid)+ReLU -> Linear(n_hid,1).
    # (Dropout layers are identity in eval mode.)
    y = jnp.maximum(jnp.dot(p, w1, preferred_element_type=f32) + c1, 0.0)
    y = jnp.maximum(jnp.dot(y, w2_ref[...], preferred_element_type=f32)
                    + c2_ref[...], 0.0)
    y = jnp.dot(y, w3_ref[...], preferred_element_type=f32) + c3_ref[...]  # (G,1)

    # Lane-dense (1, 1, G) row of per-graph scalars: mask-and-reduce move of
    # the (G, 1) column into lanes (avoids a sublane->lane reshape relayout).
    rows = lax.broadcasted_iota(jnp.int32, (G, G), 0)
    cols = lax.broadcasted_iota(jnp.int32, (G, G), 1)
    y_row = jnp.sum(jnp.where(rows == cols, y, 0.0), axis=0, keepdims=True)
    out_ref[...] = y_row.reshape(1, 1, G)


def mgcn_forward(X, A, E_avg, params, graphs_per_block=None):
    """X: (B, N, Fn)  A: (B, N, N)  E_avg: (B, N, Fe)  ->  (B, 1)"""
    assert params["w_emb"].shape[1] == N_EMBED
    B, N, Fn = X.shape
    Fe = E_avg.shape[-1]
    f_in = Fn + Fe

    vmem_cap, mxu_edge, two_tc = _tpu_generation_info()
    # ~75% of physical VMEM: ~48 MiB on v7x, ~96 MiB on v5e/v6e.
    vmem_limit = int(vmem_cap * 0.75)

    G, k = _choose_tiling(B, N, f_in, vmem_limit, mxu_edge, two_tc)
    if graphs_per_block is not None:
        G = max(k, _round_up(graphs_per_block, k))
    kN = k * N

    nblk = -(-B // G)
    B_pad = nblk * G

    # Single packed input stream: [X | E_avg] in bf16; A in bf16 (0/1 exact).
    XE = jnp.concatenate([X, E_avg], axis=-1).astype(jnp.bfloat16)
    A_bf = A.astype(jnp.bfloat16)
    if B_pad != B:
        pad = B_pad - B
        XE = jnp.pad(XE, ((0, pad), (0, 0), (0, 0)))
        A_bf = jnp.pad(A_bf, ((0, pad), (0, 0), (0, 0)))

    # Block-diagonal packed input weight: [X|E] @ w_in = [X@w_emb|E@we1|E@we2].
    w_in = jnp.zeros((f_in, 3 * N_EMBED), jnp.float32)
    w_in = w_in.at[:Fn, 0:32].set(params["w_emb"])
    w_in = w_in.at[Fn:, 32:64].set(params["we1"])
    w_in = w_in.at[Fn:, 64:96].set(params["we2"])
    w_in = w_in.astype(jnp.bfloat16)

    wn_cat = jnp.concatenate([params["wn1"], params["wn2"], params["w1"]],
                             axis=1)                                  # (32, 96)
    bias32 = jnp.concatenate([params["b_emb"], params["b1"],
                              params["b2"], params["c1"]], axis=1)    # (1, 128)

    weights = [w_in, wn_cat, params["w2"], params["w3"],
               bias32, params["c2"], params["c3"]]

    # TODO(synk): constant weight blocks could take pipeline_mode=pl.Buffered(1)
    #             (no re-fetch -> no double buffer) and A could take Buffered(3)
    #             on v5e if the A stream shows exposed DMA; skipped as minor.
    in_specs = [
        pl.BlockSpec((G, N, f_in), lambda b: (b, 0, 0)),
        pl.BlockSpec((G, N, N), lambda b: (b, 0, 0)),
    ] + [pl.BlockSpec(w.shape, lambda b: (0, 0)) for w in weights]

    out = pl.pallas_call(
        mgcn_kernel,
        out_shape=jax.ShapeDtypeStruct((nblk, 1, G), jnp.float32),
        grid=(nblk,),
        in_specs=in_specs,
        out_specs=pl.BlockSpec((1, 1, G), lambda b: (b, 0, 0)),
        scratch_shapes=[pltpu.VMEM((kN, kN), jnp.bfloat16)],
        compiler_params=pltpu.CompilerParams(
            dimension_semantics=("parallel",),
            vmem_limit_bytes=vmem_limit),
    )(XE, A_bf, *weights)

    return out.reshape(B_pad)[:B].reshape(B, 1)


def mgcn_reference(X, A, E_avg, params):
    """Plain-JAX f32 reference for correctness checking."""
    h = X @ params["w_emb"] + params["b_emb"]
    m1 = A @ (h @ params["wn1"]) + E_avg @ params["we1"] + params["b1"]
    h = h + jax.nn.relu(m1)
    m2 = A @ (h @ params["wn2"]) + E_avg @ params["we2"] + params["b2"]
    h = h + jax.nn.relu(m2)
    p = jnp.mean(h, axis=1)                       # (B, 32)
    z = jax.nn.relu(p @ params["w1"] + params["c1"])
    z = jax.nn.relu(z @ params["w2"] + params["c2"])
    z = z @ params["w3"] + params["c3"]
    return z                                      # (B, 1)


def init_params(key, n_node_fea, n_edge_fea, n_hid, n_embed=N_EMBED):
    ks = jax.random.split(key, 16)
    s = 0.1
    return {
        "w_emb": s * jax.random.normal(ks[0], (n_node_fea, n_embed), jnp.float32),
        "b_emb": s * jax.random.normal(ks[1], (1, n_embed), jnp.float32),
        "wn1":   s * jax.random.normal(ks[2], (n_embed, n_embed), jnp.float32),
        "we1":   s * jax.random.normal(ks[3], (n_edge_fea, n_embed), jnp.float32),
        "b1":    s * jax.random.normal(ks[4], (1, n_embed), jnp.float32),
        "wn2":   s * jax.random.normal(ks[5], (n_embed, n_embed), jnp.float32),
        "we2":   s * jax.random.normal(ks[6], (n_edge_fea, n_embed), jnp.float32),
        "b2":    s * jax.random.normal(ks[7], (1, n_embed), jnp.float32),
        "w1":    s * jax.random.normal(ks[8], (n_embed, n_embed), jnp.float32),
        "c1":    s * jax.random.normal(ks[9], (1, n_embed), jnp.float32),
        "w2":    s * jax.random.normal(ks[10], (n_embed, n_hid), jnp.float32),
        "c2":    s * jax.random.normal(ks[11], (1, n_hid), jnp.float32),
        "w3":    s * jax.random.normal(ks[12], (n_hid, 1), jnp.float32),
        "c3":    s * jax.random.normal(ks[13], (1, 1), jnp.float32),
    }


if __name__ == "__main__":
    # Small shapes consistent with the module.  B=8, N=16 -> one grid step of
    # G=8 graphs processed as a single k=8 block-diagonal group (kN=128).
    B, N = 8, 16                 # graphs, nodes per graph (padded)
    n_node_fea, n_edge_fea = 4, 6
    n_hid = 32

    key = jax.random.PRNGKey(0)
    k_x, k_a, k_e, k_p = jax.random.split(key, 4)

    X = jax.random.normal(k_x, (B, N, n_node_fea), jnp.float32)
    A = jax.random.bernoulli(k_a, 0.4, (B, N, N)).astype(jnp.float32)
    E_avg = jax.random.normal(k_e, (B, N, n_edge_fea), jnp.float32)
    params = init_params(k_p, n_node_fea, n_edge_fea, n_hid)

    out = mgcn_forward(X, A, E_avg, params)
    out = jax.block_until_ready(out)

    ref = mgcn_reference(X, A, E_avg, params)
    assert out.shape == (B, 1), out.shape
    # bf16 inputs / bf16 A-matmul operands vs the pure-f32 reference.
    assert jnp.allclose(out, ref, atol=2e-2, rtol=2e-2), (out, ref)

    print("KERNEL_OK")
</pallas_src>

<mosaic_0001>
module attributes {stable_mosaic.version = 11 : i64} {
  func.func @mgcn_kernel(%arg0: i32, %arg1: memref<8x16x10xbf16, #tpu.memory_space<vmem>>, %arg2: memref<8x16x16xbf16, #tpu.memory_space<vmem>>, %arg3: memref<10x96xbf16, #tpu.memory_space<vmem>>, %arg4: memref<32x96xf32, #tpu.memory_space<vmem>>, %arg5: memref<32x32xf32, #tpu.memory_space<vmem>>, %arg6: memref<32x1xf32, #tpu.memory_space<vmem>>, %arg7: memref<1x128xf32, #tpu.memory_space<vmem>>, %arg8: memref<1x32xf32, #tpu.memory_space<vmem>>, %arg9: memref<1x1xf32, #tpu.memory_space<vmem>>, %arg10: memref<1x1x8xf32, #tpu.memory_space<vmem>>, %arg11: memref<128x128xbf16, #tpu.memory_space<vmem>>) attributes {dimension_semantics = [#tpu.dimension_semantics<parallel>], iteration_bounds = array<i64: 1>, scalar_prefetch = 0 : i64, scratch_operands = 1 : i64, tpu.core_type = #tpu.core_type<tc>, window_params = [{transform_indices = @transform_0, window_bounds = array<i64: 8, 16, 10>}, {transform_indices = @transform_1, window_bounds = array<i64: 8, 16, 16>}, {pipeline_mode = #tpu.pipeline_mode<synchronous>, transform_indices = @transform_2, window_bounds = array<i64: 10, 96>}, {pipeline_mode = #tpu.pipeline_mode<synchronous>, transform_indices = @transform_3, window_bounds = array<i64: 32, 96>}, {pipeline_mode = #tpu.pipeline_mode<synchronous>, transform_indices = @transform_4, window_bounds = array<i64: 32, 32>}, {pipeline_mode = #tpu.pipeline_mode<synchronous>, transform_indices = @transform_5, window_bounds = array<i64: 32, 1>}, {pipeline_mode = #tpu.pipeline_mode<synchronous>, transform_indices = @transform_6, window_bounds = array<i64: 1, 128>}, {pipeline_mode = #tpu.pipeline_mode<synchronous>, transform_indices = @transform_7, window_bounds = array<i64: 1, 32>}, {pipeline_mode = #tpu.pipeline_mode<synchronous>, transform_indices = @transform_8, window_bounds = array<i64: 1, 1>}, {transform_indices = @transform_9, window_bounds = array<i64: 1, 1, 8>}]} {
    %c0 = arith.constant 0 : index
    %c0_0 = arith.constant 0 : index
    %0 = vector.load %arg7[%c0, %c0_0] : memref<1x128xf32, #tpu.memory_space<vmem>>, vector<1x128xf32>
    %1 = vector.extract_strided_slice %0 {offsets = [0, 0], sizes = [1, 32], strides = [1, 1]} : vector<1x128xf32> to vector<1x32xf32>
    %2 = vector.extract_strided_slice %0 {offsets = [0, 32], sizes = [1, 32], strides = [1, 1]} : vector<1x128xf32> to vector<1x32xf32>
    %3 = vector.extract_strided_slice %0 {offsets = [0, 64], sizes = [1, 32], strides = [1, 1]} : vector<1x128xf32> to vector<1x32xf32>
    %4 = vector.extract_strided_slice %0 {offsets = [0, 96], sizes = [1, 32], strides = [1, 1]} : vector<1x128xf32> to vector<1x32xf32>
    %c0_1 = arith.constant 0 : index
    %c0_2 = arith.constant 0 : index
    %5 = vector.load %arg4[%c0_1, %c0_2] : memref<32x96xf32, #tpu.memory_space<vmem>>, vector<32x96xf32>
    %6 = vector.extract_strided_slice %5 {offsets = [0, 0], sizes = [32, 32], strides = [1, 1]} : vector<32x96xf32> to vector<32x32xf32>
    %7 = vector.extract_strided_slice %5 {offsets = [0, 32], sizes = [32, 32], strides = [1, 1]} : vector<32x96xf32> to vector<32x32xf32>
    %8 = vector.extract_strided_slice %5 {offsets = [0, 64], sizes = [32, 32], strides = [1, 1]} : vector<32x96xf32> to vector<32x32xf32>
    %c0_3 = arith.constant 0 : index
    %c0_4 = arith.constant 0 : index
    %c0_5 = arith.constant 0 : index
    %9 = vector.load %arg1[%c0_3, %c0_4, %c0_5] : memref<8x16x10xbf16, #tpu.memory_space<vmem>>, vector<8x16x10xbf16>
    %10 = vector.shape_cast %9 : vector<8x16x10xbf16> to vector<128x10xbf16>
    %c0_6 = arith.constant 0 : index
    %c0_7 = arith.constant 0 : index
    %11 = vector.load %arg3[%c0_6, %c0_7] : memref<10x96xbf16, #tpu.memory_space<vmem>>, vector<10x96xbf16>
    %cst = arith.constant dense<0.000000e+00> : vector<128x96xf32>
    %12 = tpu.matmul %10, %11, %cst {dimension_numbers = #tpu.dot_dimension_numbers<[1], [0], [0], [1], [0, 0, 1, 1], [], []>} : vector<128x10xbf16>, vector<10x96xbf16>, vector<128x96xf32> -> vector<128x96xf32>
    %13 = vector.extract_strided_slice %12 {offsets = [0, 0], sizes = [128, 32], strides = [1, 1]} : vector<128x96xf32> to vector<128x32xf32>
    %14 = vector.broadcast %1 : vector<1x32xf32> to vector<128x32xf32>
    %15 = arith.addf %13, %14 : vector<128x32xf32>
    %16 = vector.extract_strided_slice %12 {offsets = [0, 32], sizes = [128, 32], strides = [1, 1]} : vector<128x96xf32> to vector<128x32xf32>
    %17 = vector.broadcast %2 : vector<1x32xf32> to vector<128x32xf32>
    %18 = arith.addf %16, %17 : vector<128x32xf32>
    %19 = vector.extract_strided_slice %12 {offsets = [0, 64], sizes = [128, 32], strides = [1, 1]} : vector<128x96xf32> to vector<128x32xf32>
    %20 = vector.broadcast %3 : vector<1x32xf32> to vector<128x32xf32>
    %21 = arith.addf %19, %20 : vector<128x32xf32>
    %cst_8 = arith.constant dense<0.000000e+00> : vector<128x32xf32>
    %22 = tpu.matmul %15, %6, %cst_8 {dimension_numbers = #tpu.dot_dimension_numbers<[1], [0], [0], [1], [0, 0, 1, 1], [], []>} : vector<128x32xf32>, vector<32x32xf32>, vector<128x32xf32> -> vector<128x32xf32>
    %23 = arith.truncf %22 : vector<128x32xf32> to vector<128x32xbf16>
    %cst_9 = arith.constant 0.000000e+00 : bf16
    %24 = vector.broadcast %cst_9 : bf16 to vector<128x128xbf16>
    %c0_10 = arith.constant 0 : index
    %c0_11 = arith.constant 0 : index
    %25 = vector.load %arg11[%c0_10, %c0_11] : memref<128x128xbf16, #tpu.memory_space<vmem>>, vector<128x128xbf16>
    tpu.vector_store %arg11[%c0_10, %c0_11], %24 {strides = array<i32>} : memref<128x128xbf16, #tpu.memory_space<vmem>>, vector<128x128xbf16>,
    %c0_12 = arith.constant 0 : index
    %c0_13 = arith.constant 0 : index
    %c0_14 = arith.constant 0 : index
    %26 = vector.load %arg2[%c0_12, %c0_13, %c0_14] : memref<8x16x16xbf16, #tpu.memory_space<vmem>>, vector<1x16x16xbf16>
    %27 = vector.shape_cast %26 : vector<1x16x16xbf16> to vector<16x16xbf16>
    %c0_15 = arith.constant 0 : index
    %c0_16 = arith.constant 0 : index
    %28 = vector.load %arg11[%c0_15, %c0_16] : memref<128x128xbf16, #tpu.memory_space<vmem>>, vector<16x16xbf16>
    tpu.vector_store %arg11[%c0_15, %c0_16], %27 {strides = array<i32>} : memref<128x128xbf16, #tpu.memory_space<vmem>>, vector<16x16xbf16>,
    %c1 = arith.constant 1 : index
    %c0_17 = arith.constant 0 : index
    %c0_18 = arith.constant 0 : index
    %29 = vector.load %arg2[%c1, %c0_17, %c0_18] : memref<8x16x16xbf16, #tpu.memory_space<vmem>>, vector<1x16x16xbf16>
    %30 = vector.shape_cast %29 : vector<1x16x16xbf16> to vector<16x16xbf16>
    %c16 = arith.constant 16 : index
    %c16_19 = arith.constant 16 : index
    %31 = vector.load %arg11[%c16, %c16_19] : memref<128x128xbf16, #tpu.memory_space<vmem>>, vector<16x16xbf16>
    tpu.vector_store %arg11[%c16, %c16_19], %30 {strides = array<i32>} : memref<128x128xbf16, #tpu.memory_space<vmem>>, vector<16x16xbf16>,
    %c2 = arith.constant 2 : index
    %c0_20 = arith.constant 0 : index
    %c0_21 = arith.constant 0 : index
    %32 = vector.load %arg2[%c2, %c0_20, %c0_21] : memref<8x16x16xbf16, #tpu.memory_space<vmem>>, vector<1x16x16xbf16>
    %33 = vector.shape_cast %32 : vector<1x16x16xbf16> to vector<16x16xbf16>
    %c32 = arith.constant 32 : index
    %c32_22 = arith.constant 32 : index
    %34 = vector.load %arg11[%c32, %c32_22] : memref<128x128xbf16, #tpu.memory_space<vmem>>, vector<16x16xbf16>
    tpu.vector_store %arg11[%c32, %c32_22], %33 {strides = array<i32>} : memref<128x128xbf16, #tpu.memory_space<vmem>>, vector<16x16xbf16>,
    %c3 = arith.constant 3 : index
    %c0_23 = arith.constant 0 : index
    %c0_24 = arith.constant 0 : index
    %35 = vector.load %arg2[%c3, %c0_23, %c0_24] : memref<8x16x16xbf16, #tpu.memory_space<vmem>>, vector<1x16x16xbf16>
    %36 = vector.shape_cast %35 : vector<1x16x16xbf16> to vector<16x16xbf16>
    %c48 = arith.constant 48 : index
    %c48_25 = arith.constant 48 : index
    %37 = vector.load %arg11[%c48, %c48_25] : memref<128x128xbf16, #tpu.memory_space<vmem>>, vector<16x16xbf16>
    tpu.vector_store %arg11[%c48, %c48_25], %36 {strides = array<i32>} : memref<128x128xbf16, #tpu.memory_space<vmem>>, vector<16x16xbf16>,
    %c4 = arith.constant 4 : index
    %c0_26 = arith.constant 0 : index
    %c0_27 = arith.constant 0 : index
    %38 = vector.load %arg2[%c4, %c0_26, %c0_27] : memref<8x16x16xbf16, #tpu.memory_space<vmem>>, vector<1x16x16xbf16>
    %39 = vector.shape_cast %38 : vector<1x16x16xbf16> to vector<16x16xbf16>
    %c64 = arith.constant 64 : index
    %c64_28 = arith.constant 64 : index
    %40 = vector.load %arg11[%c64, %c64_28] : memref<128x128xbf16, #tpu.memory_space<vmem>>, vector<16x16xbf16>
    tpu.vector_store %arg11[%c64, %c64_28], %39 {strides = array<i32>} : memref<128x128xbf16, #tpu.memory_space<vmem>>, vector<16x16xbf16>,
    %c5 = arith.constant 5 : index
    %c0_29 = arith.constant 0 : index
    %c0_30 = arith.constant 0 : index
    %41 = vector.load %arg2[%c5, %c0_29, %c0_30] : memref<8x16x16xbf16, #tpu.memory_space<vmem>>, vector<1x16x16xbf16>
    %42 = vector.shape_cast %41 : vector<1x16x16xbf16> to vector<16x16xbf16>
    %c80 = arith.constant 80 : index
    %c80_31 = arith.constant 80 : index
    %43 = vector.load %arg11[%c80, %c80_31] : memref<128x128xbf16, #tpu.memory_space<vmem>>, vector<16x16xbf16>
    tpu.vector_store %arg11[%c80, %c80_31], %42 {strides = array<i32>} : memref<128x128xbf16, #tpu.memory_space<vmem>>, vector<16x16xbf16>,
    %c6 = arith.constant 6 : index
    %c0_32 = arith.constant 0 : index
    %c0_33 = arith.constant 0 : index
    %44 = vector.load %arg2[%c6, %c0_32, %c0_33] : memref<8x16x16xbf16, #tpu.memory_space<vmem>>, vector<1x16x16xbf16>
    %45 = vector.shape_cast %44 : vector<1x16x16xbf16> to vector<16x16xbf16>
    %c96 = arith.constant 96 : index
    %c96_34 = arith.constant 96 : index
    %46 = vector.load %arg11[%c96, %c96_34] : memref<128x128xbf16, #tpu.memory_space<vmem>>, vector<16x16xbf16>
    tpu.vector_store %arg11[%c96, %c96_34], %45 {strides = array<i32>} : memref<128x128xbf16, #tpu.memory_space<vmem>>, vector<16x16xbf16>,
    %c7 = arith.constant 7 : index
    %c0_35 = arith.constant 0 : index
    %c0_36 = arith.constant 0 : index
    %47 = vector.load %arg2[%c7, %c0_35, %c0_36] : memref<8x16x16xbf16, #tpu.memory_space<vmem>>, vector<1x16x16xbf16>
    %48 = vector.shape_cast %47 : vector<1x16x16xbf16> to vector<16x16xbf16>
    %c112 = arith.constant 112 : index
    %c112_37 = arith.constant 112 : index
    %49 = vector.load %arg11[%c112, %c112_37] : memref<128x128xbf16, #tpu.memory_space<vmem>>, vector<16x16xbf16>
    tpu.vector_store %arg11[%c112, %c112_37], %48 {strides = array<i32>} : memref<128x128xbf16, #tpu.memory_space<vmem>>, vector<16x16xbf16>,
    %c0_38 = arith.constant 0 : index
    %c0_39 = arith.constant 0 : index
    %50 = vector.load %arg11[%c0_38, %c0_39] : memref<128x128xbf16, #tpu.memory_space<vmem>>, vector<128x128xbf16>
    %cst_40 = arith.constant dense<0.000000e+00> : vector<128x32xf32>
    %51 = tpu.matmul %50, %23, %cst_40 {dimension_numbers = #tpu.dot_dimension_numbers<[1], [0], [0], [1], [0, 0, 1, 1], [], []>} : vector<128x128xbf16>, vector<128x32xbf16>, vector<128x32xf32> -> vector<128x32xf32>
    %52 = arith.addf %51, %18 : vector<128x32xf32>
    %cst_41 = arith.constant 0.000000e+00 : f32
    %53 = vector.broadcast %cst_41 : f32 to vector<128x32xf32>
    %54 = arith.maximumf %52, %53 : vector<128x32xf32>
    %55 = arith.addf %15, %54 : vector<128x32xf32>
    %cst_42 = arith.constant dense<0.000000e+00> : vector<128x32xf32>
    %56 = tpu.matmul %55, %7, %cst_42 {dimension_numbers = #tpu.dot_dimension_numbers<[1], [0], [0], [1], [0, 0, 1, 1], [], []>} : vector<128x32xf32>, vector<32x32xf32>, vector<128x32xf32> -> vector<128x32xf32>
    %57 = arith.truncf %56 : vector<128x32xf32> to vector<128x32xbf16>
    %cst_43 = arith.constant dense<0.000000e+00> : vector<128x32xf32>
    %58 = tpu.matmul %50, %57, %cst_43 {dimension_numbers = #tpu.dot_dimension_numbers<[1], [0], [0], [1], [0, 0, 1, 1], [], []>} : vector<128x128xbf16>, vector<128x32xbf16>, vector<128x32xf32> -> vector<128x32xf32>
    %59 = arith.addf %58, %21 : vector<128x32xf32>
    %cst_44 = arith.constant 0.000000e+00 : f32
    %60 = vector.broadcast %cst_44 : f32 to vector<128x32xf32>
    %61 = arith.maximumf %59, %60 : vector<128x32xf32>
    %62 = arith.addf %55, %61 : vector<128x32xf32>
    %63 = vector.shape_cast %62 : vector<128x32xf32> to vector<8x16x32xf32>
    %cst_45 = arith.constant dense<0.000000e+00> : vector<8x32xf32>
    %64 = vector.multi_reduction <add>, %63, %cst_45 [1] : vector<8x16x32xf32> to vector<8x32xf32>
    %cst_46 = arith.constant 1.600000e+01 : f32
    %65 = vector.broadcast %cst_46 : f32 to vector<8x32xf32>
    %66 = arith.divf %64, %65 : vector<8x32xf32>
    %cst_47 = arith.constant dense<0.000000e+00> : vector<8x32xf32>
    %67 = tpu.matmul %66, %8, %cst_47 {dimension_numbers = #tpu.dot_dimension_numbers<[1], [0], [0], [1], [0, 0, 1, 1], [], []>} : vector<8x32xf32>, vector<32x32xf32>, vector<8x32xf32> -> vector<8x32xf32>
    %68 = vector.broadcast %4 : vector<1x32xf32> to vector<8x32xf32>
    %69 = arith.addf %67, %68 : vector<8x32xf32>
    %cst_48 = arith.constant 0.000000e+00 : f32
    %70 = vector.broadcast %cst_48 : f32 to vector<8x32xf32>
    %71 = arith.maximumf %69, %70 : vector<8x32xf32>
    %c0_49 = arith.constant 0 : index
    %c0_50 = arith.constant 0 : index
    %72 = vector.load %arg5[%c0_49, %c0_50] : memref<32x32xf32, #tpu.memory_space<vmem>>, vector<32x32xf32>
    %cst_51 = arith.constant dense<0.000000e+00> : vector<8x32xf32>
    %73 = tpu.matmul %71, %72, %cst_51 {dimension_numbers = #tpu.dot_dimension_numbers<[1], [0], [0], [1], [0, 0, 1, 1], [], []>} : vector<8x32xf32>, vector<32x32xf32>, vector<8x32xf32> -> vector<8x32xf32>
    %c0_52 = arith.constant 0 : index
    %c0_53 = arith.constant 0 : index
    %74 = vector.load %arg8[%c0_52, %c0_53] : memref<1x32xf32, #tpu.memory_space<vmem>>, vector<1x32xf32>
    %75 = vector.broadcast %74 : vector<1x32xf32> to vector<8x32xf32>
    %76 = arith.addf %73, %75 : vector<8x32xf32>
    %cst_54 = arith.constant 0.000000e+00 : f32
    %77 = vector.broadcast %cst_54 : f32 to vector<8x32xf32>
    %78 = arith.maximumf %76, %77 : vector<8x32xf32>
    %c0_55 = arith.constant 0 : index
    %c0_56 = arith.constant 0 : index
    %79 = vector.load %arg6[%c0_55, %c0_56] : memref<32x1xf32, #tpu.memory_space<vmem>>, vector<32x1xf32>
    %cst_57 = arith.constant dense<0.000000e+00> : vector<8x1xf32>
    %80 = tpu.matmul %78, %79, %cst_57 {dimension_numbers = #tpu.dot_dimension_numbers<[1], [0], [0], [1], [0, 0, 1, 1], [], []>} : vector<8x32xf32>, vector<32x1xf32>, vector<8x1xf32> -> vector<8x1xf32>
    %c0_58 = arith.constant 0 : index
    %c0_59 = arith.constant 0 : index
    %81 = vector.load %arg9[%c0_58, %c0_59] : memref<1x1xf32, #tpu.memory_space<vmem>>, vector<1x1xf32>
    %82 = vector.broadcast %81 : vector<1x1xf32> to vector<8x1xf32>
    %83 = arith.addf %80, %82 : vector<8x1xf32>
    %84 = tpu.iota {dimensions = array<i32: 0>} : vector<8x8xi32>
    %85 = tpu.iota {dimensions = array<i32: 1>} : vector<8x8xi32>
    %86 = arith.cmpi eq, %84, %85 : vector<8x8xi32>
    %cst_60 = arith.constant 0.000000e+00 : f32
    %87 = vector.shape_cast %83 : vector<8x1xf32> to vector<8x1xf32>
    %88 = vector.broadcast %87 : vector<8x1xf32> to vector<8x8xf32>
    %89 = vector.broadcast %cst_60 : f32 to vector<8x8xf32>
    %90 = arith.select %86, %88, %89 : vector<8x8xi1>, vector<8x8xf32>
    %cst_61 = arith.constant dense<0.000000e+00> : vector<8xf32>
    %91 = vector.multi_reduction <add>, %90, %cst_61 [0] : vector<8x8xf32> to vector<8xf32>
    %92 = vector.shape_cast %91 : vector<8xf32> to vector<1x8xf32>
    %93 = vector.shape_cast %92 : vector<1x8xf32> to vector<1x1x8xf32>
    %c0_62 = arith.constant 0 : index
    %c0_63 = arith.constant 0 : index
    %c0_64 = arith.constant 0 : index
    %94 = vector.load %arg10[%c0_62, %c0_63, %c0_64] : memref<1x1x8xf32, #tpu.memory_space<vmem>>, vector<1x1x8xf32>
    tpu.vector_store %arg10[%c0_62, %c0_63, %c0_64], %93 {strides = array<i32>} : memref<1x1x8xf32, #tpu.memory_space<vmem>>, vector<1x1x8xf32>,
    return
  }
  func.func @transform_0(%arg0: i32) -> (i32, i32, i32) {
    %c0_i32 = arith.constant 0 : i32
    %c0_i32_0 = arith.constant 0 : i32
    %c0_i32_1 = arith.constant 0 : i32
    return %arg0, %c0_i32, %c0_i32_0 : i32, i32, i32
  }
  func.func @transform_1(%arg0: i32) -> (i32, i32, i32) {
    %c0_i32 = arith.constant 0 : i32
    %c0_i32_0 = arith.constant 0 : i32
    %c0_i32_1 = arith.constant 0 : i32
    return %arg0, %c0_i32, %c0_i32_0 : i32, i32, i32
  }
  func.func @transform_2(%arg0: i32) -> (i32, i32) {
    %c0_i32 = arith.constant 0 : i32
    %c0_i32_0 = arith.constant 0 : i32
    %c0_i32_1 = arith.constant 0 : i32
    return %c0_i32, %c0_i32_0 : i32, i32
  }
  func.func @transform_3(%arg0: i32) -> (i32, i32) {
    %c0_i32 = arith.constant 0 : i32
    %c0_i32_0 = arith.constant 0 : i32
    %c0_i32_1 = arith.constant 0 : i32
    return %c0_i32, %c0_i32_0 : i32, i32
  }
  func.func @transform_4(%arg0: i32) -> (i32, i32) {
    %c0_i32 = arith.constant 0 : i32
    %c0_i32_0 = arith.constant 0 : i32
    %c0_i32_1 = arith.constant 0 : i32
    return %c0_i32, %c0_i32_0 : i32, i32
  }
  func.func @transform_5(%arg0: i32) -> (i32, i32) {
    %c0_i32 = arith.constant 0 : i32
    %c0_i32_0 = arith.constant 0 : i32
    %c0_i32_1 = arith.constant 0 : i32
    return %c0_i32, %c0_i32_0 : i32, i32
  }
  func.func @transform_6(%arg0: i32) -> (i32, i32) {
    %c0_i32 = arith.constant 0 : i32
    %c0_i32_0 = arith.constant 0 : i32
    %c0_i32_1 = arith.constant 0 : i32
    return %c0_i32, %c0_i32_0 : i32, i32
  }
  func.func @transform_7(%arg0: i32) -> (i32, i32) {
    %c0_i32 = arith.constant 0 : i32
    %c0_i32_0 = arith.constant 0 : i32
    %c0_i32_1 = arith.constant 0 : i32
    return %c0_i32, %c0_i32_0 : i32, i32
  }
  func.func @transform_8(%arg0: i32) -> (i32, i32) {
    %c0_i32 = arith.constant 0 : i32
    %c0_i32_0 = arith.constant 0 : i32
    %c0_i32_1 = arith.constant 0 : i32
    return %c0_i32, %c0_i32_0 : i32, i32
  }
  func.func @transform_9(%arg0: i32) -> (i32, i32, i32) {
    %c0_i32 = arith.constant 0 : i32
    %c0_i32_0 = arith.constant 0 : i32
    %c0_i32_1 = arith.constant 0 : i32
    return %arg0, %c0_i32, %c0_i32_0 : i32, i32, i32
  }
}

</mosaic_0001>

<llo_original>
// kernel: tpu_custom_call.1
$region0: #{tpu_custom_call.1}
  #allocation0 [shape = 'u32[]', space=smem, size = 0x4, offset = 0x4, fixed_abs, tag = 'smem constant byte address 0x4 - core index']
  #allocation1 [shape = 'u32[144,128]{1,0:T(1,128)}', space=vmem, size = 0x12000, scoped, tag = 'internal scratch']
  #allocation2 [shape = 'bf16[128,128]{1,0:T(16,128)(2,1)}', space=vmem, size = 0x8000, scoped, tag = 'scratch operand']
  #allocation3 [shape = 'f32[1,1]{1,0:T(1,128)S(1)}', space=vmem, size = 0x200, scoped, tag = 'scoped memory for tpu_custom_call.1']
  %s0 = inlined_call_operand.vmem [shape: bf16[8,16,10], index: 0, kind: input, shape index: {}]
  %s1 = inlined_call_operand.vmem [shape: bf16[8,16,16], index: 1, kind: input, shape index: {}]
  %s2 = inlined_call_operand.vmem [shape: bf16[10,96], index: 2, kind: input, shape index: {}]
  %s3 = inlined_call_operand.vmem [shape: f32[32,96], index: 3, kind: input, shape index: {}]
  %s4 = inlined_call_operand.vmem [shape: f32[32,32], index: 4, kind: input, shape index: {}]
  %s5 = inlined_call_operand.vmem [shape: f32[32,1], index: 5, kind: input, shape index: {}]
  %s6 = inlined_call_operand.vmem [shape: f32[1,128], index: 6, kind: input, shape index: {}]
  %s7 = inlined_call_operand.vmem [shape: f32[1,32], index: 7, kind: input, shape index: {}]
  %s8 = inlined_call_operand.<no memory space> [shape: f32[1,1], index: 8, kind: input, shape index: {}]
  %s9 = inlined_call_operand.hbm [shape: f32[1,1,8], index: 9, kind: output, shape index: {}]
  %s10 = sld [smem:[#allocation0]]
  $region46: #{tpu_custom_call.1} parent=0
    _
  %s12 = ssub.s32 1, %s10
  %s13 = scalar_select 0, %s12, %s10
  %v14 = vstv %s8
  %15 = vst [vmem:[#allocation3] sm:$0x1] %v14
  $region1: #{tpu_custom_call.1} parent=0
    #allocation4 [shape = 'u8[512]{0}', space=vmem, size = 0x400, scoped, tag = 'output window, operand 0, single buffered']
    #allocation5 [shape = 's32[1]{0}', space=sflag, size = 0x4, scoped, tag = 'scoped memory for tpu_custom_call.1']
    %16 = vsyncpa [#allocation5], 0
    // Predicated region
    $region2: #{tpu_custom_call.1} parent=1 // pred_check
      _
    $region3: #{tpu_custom_call.1} parent=1 // pred_check_branch
      %18 = sbr.rel (0) target = $region5
    $region4: #{tpu_custom_call.1} parent=1 // pred_region
      _
    $region5: #{tpu_custom_call.1} parent=1 // pred_fallthru
      _
    // Predicated region
    $region6: #{tpu_custom_call.1} parent=1 // pred_check
      _
    $region7: #{tpu_custom_call.1} parent=1 // pred_check_branch
      %20 = sbr.rel (0) target = $region9
    $region8: #{tpu_custom_call.1} parent=1 // pred_region
      _
    $region9: #{tpu_custom_call.1} parent=1 // pred_fallthru
      _
    // Predicated region
    $region10: #{tpu_custom_call.1} parent=1 // pred_check
      _
    $region11: #{tpu_custom_call.1} parent=1 // pred_check_branch
      %22 = sbr.rel (0) target = $region13
    $region12: #{tpu_custom_call.1} parent=1 // pred_region
      _
    $region13: #{tpu_custom_call.1} parent=1 // pred_fallthru
      _
    // Predicated region
    $region14: #{tpu_custom_call.1} parent=1 // pred_check
      _
    $region15: #{tpu_custom_call.1} parent=1 // pred_check_branch
      %24 = sbr.rel (0) target = $region17
    $region16: #{tpu_custom_call.1} parent=1 // pred_region
      _
    $region17: #{tpu_custom_call.1} parent=1 // pred_fallthru
      _
    // Predicated region
    $region18: #{tpu_custom_call.1} parent=1 // pred_check
      _
    $region19: #{tpu_custom_call.1} parent=1 // pred_check_branch
      %26 = sbr.rel (0) target = $region21
    $region20: #{tpu_custom_call.1} parent=1 // pred_region
      _
    $region21: #{tpu_custom_call.1} parent=1 // pred_fallthru
      _
    // Predicated region
    $region22: #{tpu_custom_call.1} parent=1 // pred_check
      _
    $region23: #{tpu_custom_call.1} parent=1 // pred_check_branch
      %28 = sbr.rel (0) target = $region25
    $region24: #{tpu_custom_call.1} parent=1 // pred_region
      _
    $region25: #{tpu_custom_call.1} parent=1 // pred_fallthru
      _
    // Predicated region
    $region26: #{tpu_custom_call.1} parent=1 // pred_check
      _
    $region27: #{tpu_custom_call.1} parent=1 // pred_check_branch
      %30 = sbr.rel (0) target = $region29
    $region28: #{tpu_custom_call.1} parent=1 // pred_region
      _
    $region29: #{tpu_custom_call.1} parent=1 // pred_fallthru
      _
    // Predicated region
    $region30: #{tpu_custom_call.1} parent=1 // pred_check
      _
    $region31: #{tpu_custom_call.1} parent=1 // pred_check_branch
      %32 = sbr.rel (0) target = $region33
    $region32: #{tpu_custom_call.1} parent=1 // pred_region
      _
    $region33: #{tpu_custom_call.1} parent=1 // pred_fallthru
      _
    // Predicated region
    $region34: #{tpu_custom_call.1} parent=1 // pred_check
      _
    $region35: #{tpu_custom_call.1} parent=1 // pred_check_branch
      %34 = sbr.rel (0) target = $region37
    $region36: #{tpu_custom_call.1} parent=1 // pred_region
      _
    $region37: #{tpu_custom_call.1} parent=1 // pred_fallthru
      _
    %v36 = vld [vmem:[%s6] sm:$0x1]
    %v37 = vld [vmem:[%s3] sm:$0xff]
    %v38 = vld [vmem:[%s3 + $0x8] sm:$0xff]
    %v39 = vld [vmem:[%s3 + $0x10] sm:$0xff]
    %v40 = vld [vmem:[%s3 + $0x18] sm:$0xff]
    %v41 = vld [vmem:[%s0] sm:$0xf]
    %v42 = vld [vmem:[%s0 + $0x4] sm:$0xf]
    %v43 = vld [vmem:[%s0 + $0x8] sm:$0xf]
    %v44 = vld [vmem:[%s0 + $0xc] sm:$0xf]
    %v45 = vld [vmem:[%s0 + $0x10] sm:$0xf]
    %v46 = vld [vmem:[%s0 + $0x14] sm:$0xf]
    %v47 = vld [vmem:[%s0 + $0x18] sm:$0xf]
    %v48 = vld [vmem:[%s0 + $0x1c] sm:$0xf]
    %v49 = vld [vmem:[%s0 + $0x20] sm:$0xf]
    %v50 = vld [vmem:[%s0 + $0x24] sm:$0xf]
    %v51 = vld [vmem:[%s0 + $0x28] sm:$0xf]
    %v52 = vld [vmem:[%s0 + $0x2c] sm:$0xf]
    %v53 = vld [vmem:[%s0 + $0x30] sm:$0xf]
    %v54 = vld [vmem:[%s0 + $0x34] sm:$0xf]
    %v55 = vld [vmem:[%s0 + $0x38] sm:$0xf]
    %v56 = vld [vmem:[%s0 + $0x3c] sm:$0xf]
    %v57 = vld [vmem:[%s2] sm:$0xf]
    %v58 = vld [vmem:[%s2 + $0x4] sm:$0x1]
    %v75 = vunpack.c.l.b16 %v41
    %v76 = vunpack.c.l.b16 %v42
    %v77 = vunpack.c.l.b16 %v43
    %v78 = vunpack.c.l.b16 %v44
    %v79 = vunpack.c.l.b16 %v45
    %v80 = vunpack.c.l.b16 %v46
    %v81 = vunpack.c.l.b16 %v47
    %v82 = vunpack.c.l.b16 %v48
    %v83 = vunpack.c.l.b16 %v49
    %v84 = vunpack.c.l.b16 %v50
    %v85 = vunpack.c.l.b16 %v51
    %v86 = vunpack.c.l.b16 %v52
    %v87 = vunpack.c.l.b16 %v53
    %v88 = vunpack.c.l.b16 %v54
    %v89 = vunpack.c.l.b16 %v55
    %v90 = vunpack.c.l.b16 %v56
    %v91 = vpack.c.b16 %v76, %v75
    %v92 = vpack.c.b16 %v78, %v77
    %v93 = vpack.c.b16 %v80, %v79
    %v94 = vpack.c.b16 %v82, %v81
    %v95 = vpack.c.b16 %v84, %v83
    %v96 = vpack.c.b16 %v86, %v85
    %v97 = vpack.c.b16 %v88, %v87
    %v98 = vpack.c.b16 %v90, %v89
    %v101 = vunpack.c.l.b16 %v57
    %v102 = vunpack.c.l.b16 %v58
    %v103 = vpack.c.b16 %v102, %v101
    %vm104 = vcmask 80896
    %v106 = vsel %vm104, %v91, 0
    %v109 = vsel %vm104, %v92, 0
    %v112 = vsel %vm104, %v93, 0
    %v115 = vsel %vm104, %v94, 0
    %v118 = vsel %vm104, %v95, 0
    %v121 = vsel %vm104, %v96, 0
    %v124 = vsel %vm104, %v97, 0
    %v127 = vsel %vm104, %v98, 0
    %vm129 = vcmask 1044480
    %v131 = vsel %vm129, %v103, 0
    %133 = vmatprep.subr.bf16.mxu0 0
    %134 = vmatpush1.bf16.msra.mxu0 %v131
    %135 = vmatprep.subr.bf16.mxu0 0
    %136 = vmatpush1.bf16.msra.mxu0 0
    %137 = vmatprep.subr.bf16.mxu0 0
    %138 = vmatpush1.bf16.msra.mxu0 0
    %139 = vmatprep.subr.bf16.mxu0 0
    %140 = vmatpush1.bf16.msra.mxu0 0
    %141 = vmatprep.subr.bf16.mxu0 0
    %142 = vmatpush1.bf16.msra.mxu0 0
    %143 = vmatprep.subr.bf16.mxu0 0
    %144 = vmatpush1.bf16.msra.mxu0 0
    %145 = vmatprep.subr.bf16.mxu0 0
    %146 = vmatpush1.bf16.msra.mxu0 0
    %147 = vmatprep.subr.bf16.mxu0 0
    %148 = vmatpush1.bf16.msra.mxu0 0
    %149 = vmatprep.subr.bf16.mxu0 0
    %150 = vmatpush1.bf16.msra.mxu0 0
    %151 = vmatprep.subr.bf16.mxu0 0
    %152 = vmatpush1.bf16.msra.mxu0 0
    %153 = vmatprep.subr.bf16.mxu0 0
    %154 = vmatpush1.bf16.msra.mxu0 0
    %155 = vmatprep.subr.bf16.mxu0 0
    %156 = vmatpush1.bf16.msra.mxu0 0
    %157 = vmatprep.subr.bf16.mxu0 0
    %158 = vmatpush1.bf16.msra.mxu0 0
    %159 = vmatprep.subr.bf16.mxu0 0
    %160 = vmatpush1.bf16.msra.mxu0 0
    %161 = vmatprep.subr.bf16.mxu0 0
    %162 = vmatpush1.bf16.msra.mxu0 0
    %163 = vmatprep.subr.bf16.mxu0 0
    %164 = vmatpush1.bf16.msra.mxu0 0
    %165 = vmatprep.mubr.bf16.mxu0 0
    %166 = vmatmul.mubr.bf16.gmra.mrb[0].mxu0 %v106
    %v167 = vpop.f32.mrb[0].mxu0
    %v168 = vadd.f32 0.0, %v167
    %v169 = vpop.f32.mrb[0].mxu0
    %v170 = vpop.f32.mrb[0].mxu0
    %v171 = vadd.f32 0.0, %v170
    %v172 = vpop.f32.mrb[0].mxu0
    %173 = vmatprep.mubr.bf16.mxu0 0
    %174 = vmatmul.mubr.bf16.gmra.mrb[0].mxu0 %v109
    %v175 = vpop.f32.mrb[0].mxu0
    %v176 = vadd.f32 0.0, %v175
    %v177 = vpop.f32.mrb[0].mxu0
    %v178 = vpop.f32.mrb[0].mxu0
    %v179 = vadd.f32 0.0, %v178
    %v180 = vpop.f32.mrb[0].mxu0
    %181 = vmatprep.mubr.bf16.mxu0 0
    %182 = vmatmul.mubr.bf16.gmra.mrb[0].mxu0 %v112
    %v183 = vpop.f32.mrb[0].mxu0
    %v184 = vadd.f32 0.0, %v183
    %v185 = vpop.f32.mrb[0].mxu0
    %v186 = vpop.f32.mrb[0].mxu0
    %v187 = vadd.f32 0.0, %v186
    %v188 = vpop.f32.mrb[0].mxu0
    %189 = vmatprep.mubr.bf16.mxu0 0
    %190 = vmatmul.mubr.bf16.gmra.mrb[0].mxu0 %v115
    %v191 = vpop.f32.mrb[0].mxu0
    %v192 = vadd.f32 0.0, %v191
    %v193 = vpop.f32.mrb[0].mxu0
    %v194 = vpop.f32.mrb[0].mxu0
    %v195 = vadd.f32 0.0, %v194
    %v196 = vpop.f32.mrb[0].mxu0
    %197 = vmatprep.mubr.bf16.mxu0 0
    %198 = vmatmul.mubr.bf16.gmra.mrb[0].mxu0 %v118
    %v199 = vpop.f32.mrb[0].mxu0
    %v200 = vadd.f32 0.0, %v199
    %v201 = vpop.f32.mrb[0].mxu0
    %v202 = vpop.f32.mrb[0].mxu0
    %v203 = vadd.f32 0.0, %v202
    %v204 = vpop.f32.mrb[0].mxu0
    %205 = vmatprep.mubr.bf16.mxu0 0
    %206 = vmatmul.mubr.bf16.gmra.mrb[0].mxu0 %v121
    %v207 = vpop.f32.mrb[0].mxu0
    %v208 = vadd.f32 0.0, %v207
    %v209 = vpop.f32.mrb[0].mxu0
    %v210 = vpop.f32.mrb[0].mxu0
    %v211 = vadd.f32 0.0, %v210
    %v212 = vpop.f32.mrb[0].mxu0
    %213 = vmatprep.mubr.bf16.mxu0 0
    %214 = vmatmul.mubr.bf16.gmra.mrb[0].mxu0 %v124
    %v215 = vpop.f32.mrb[0].mxu0
    %v216 = vadd.f32 0.0, %v215
    %v217 = vpop.f32.mrb[0].mxu0
    %v218 = vpop.f32.mrb[0].mxu0
    %v219 = vadd.f32 0.0, %v218
    %v220 = vpop.f32.mrb[0].mxu0
    %221 = vmatprep.mubr.bf16.mxu0 0
    %222 = vmatmul.mubr.bf16.gmra.mrb[0].mxu0 %v127
    %v223 = vpop.f32.mrb[0].mxu0
    %v224 = vadd.f32 0.0, %v223
    %v225 = vpop.f32.mrb[0].mxu0
    %v226 = vpop.f32.mrb[0].mxu0
    %v227 = vadd.f32 0.0, %v226
    %v228 = vpop.f32.mrb[0].mxu0
    %229 = vdwg.mxu0
    %v231 = vlaneseq
    %v232 = vshrl.u32 %v231, 7
    %v233 = vsub.s32 0, %v232
    %v234 = vrot.slane %v36, %v233
    %v236 = vadd.f32 %v168, %v234
    %v237 = vadd.f32 %v171, %v234
    %v238 = vadd.f32 %v176, %v234
    %v239 = vadd.f32 %v179, %v234
    %v240 = vadd.f32 %v184, %v234
    %v241 = vadd.f32 %v187, %v234
    %v242 = vadd.f32 %v192, %v234
    %v243 = vadd.f32 %v195, %v234
    %v244 = vadd.f32 %v200, %v234
    %v245 = vadd.f32 %v203, %v234
    %v246 = vadd.f32 %v208, %v234
    %v247 = vadd.f32 %v211, %v234
    %v248 = vadd.f32 %v216, %v234
    %v249 = vadd.f32 %v219, %v234
    %v250 = vadd.f32 %v224, %v234
    %v251 = vadd.f32 %v227, %v234
    %vm252 = vcmask 261120
    %v254 = vsel %vm252, %v236, 0
    %v257 = vsel %vm252, %v237, 0
    %v260 = vsel %vm252, %v238, 0
    %v263 = vsel %vm252, %v239, 0
    %v266 = vsel %vm252, %v240, 0
    %v269 = vsel %vm252, %v241, 0
    %v272 = vsel %vm252, %v242, 0
    %v275 = vsel %vm252, %v243, 0
    %v278 = vsel %vm252, %v244, 0
    %v281 = vsel %vm252, %v245, 0
    %v284 = vsel %vm252, %v246, 0
    %v287 = vsel %vm252, %v247, 0
    %v290 = vsel %vm252, %v248, 0
    %v293 = vsel %vm252, %v249, 0
    %v296 = vsel %vm252, %v250, 0
    %v299 = vsel %vm252, %v251, 0
    %301 = vmatprep.subr.mxu0 0.0
    %302 = vmatpush1.msra.mxu0 %v37
    %303 = vmatprep.subr.mxu0 0.0
    %304 = vmatpush1.msra.mxu0 %v38
    %305 = vmatprep.subr.mxu0 0.0
    %306 = vmatpush1.msra.mxu0 %v39
    %307 = vmatprep.subr.mxu0 0.0
    %308 = vmatpush1.msra.mxu0 %v40
    %309 = vmatprep.subr.mxu0 0.0
    %310 = vmatpush1.msra.mxu0 0.0
    %311 = vmatprep.subr.mxu0 0.0
    %312 = vmatpush1.msra.mxu0 0.0
    %313 = vmatprep.subr.mxu0 0.0
    %314 = vmatpush1.msra.mxu0 0.0
    %315 = vmatprep.subr.mxu0 0.0
    %316 = vmatpush1.msra.mxu0 0.0
    %317 = vmatprep.subr.mxu0 0.0
    %318 = vmatpush1.msra.mxu0 0.0
    %319 = vmatprep.subr.mxu0 0.0
    %320 = vmatpush1.msra.mxu0 0.0
    %321 = vmatprep.subr.mxu0 0.0
    %322 = vmatpush1.msra.mxu0 0.0
    %323 = vmatprep.subr.mxu0 0.0
    %324 = vmatpush1.msra.mxu0 0.0
    %325 = vmatprep.subr.mxu0 0.0
    %326 = vmatpush1.msra.mxu0 0.0
    %327 = vmatprep.subr.mxu0 0.0
    %328 = vmatpush1.msra.mxu0 0.0
    %329 = vmatprep.subr.mxu0 0.0
    %330 = vmatpush1.msra.mxu0 0.0
    %331 = vmatprep.subr.mxu0 0.0
    %332 = vmatpush1.msra.mxu0 0.0
    %333 = vmatprep.subr.mxu0 0.0
    %334 = vmatpush1.msra.mxu0 0.0
    %335 = vmatprep.subr.mxu0 0.0
    %336 = vmatpush1.msra.mxu0 0.0
    %337 = vmatprep.subr.mxu0 0.0
    %338 = vmatpush1.msra.mxu0 0.0
    %339 = vmatprep.subr.mxu0 0.0
    %340 = vmatpush1.msra.mxu0 0.0
    %341 = vmatprep.subr.mxu0 0.0
    %342 = vmatpush1.msra.mxu0 0.0
    %343 = vmatprep.subr.mxu0 0.0
    %344 = vmatpush1.msra.mxu0 0.0
    %345 = vmatprep.subr.mxu0 0.0
    %346 = vmatpush1.msra.mxu0 0.0
    %347 = vmatprep.subr.mxu0 0.0
    %348 = vmatpush1.msra.mxu0 0.0
    %349 = vmatprep.subr.mxu0 0.0
    %350 = vmatpush1.msra.mxu0 0.0
    %351 = vmatprep.subr.mxu0 0.0
    %352 = vmatpush1.msra.mxu0 0.0
    %353 = vmatprep.subr.mxu0 0.0
    %354 = vmatpush1.msra.mxu0 0.0
    %355 = vmatprep.subr.mxu0 0.0
    %356 = vmatpush1.msra.mxu0 0.0
    %357 = vmatprep.subr.mxu0 0.0
    %358 = vmatpush1.msra.mxu0 0.0
    %359 = vmatprep.subr.mxu0 0.0
    %360 = vmatpush1.msra.mxu0 0.0
    %361 = vmatprep.subr.mxu0 0.0
    %362 = vmatpush1.msra.mxu0 0.0
    %363 = vmatprep.subr.mxu0 0.0
    %364 = vmatpush1.msra.mxu0 0.0
    %365 = vmatprep.mubr.f32.mxu0 0.0
    %366 = vmatmul.mubr.f32.gmra.mrb[0].mxu0 %v254
    %v367 = vpop.f32.mrb[0].mxu0
    %v368 = vadd.f32 0.0, %v367
    %v369 = vpop.f32.mrb[0].mxu0
    %370 = vmatprep.mubr.f32.mxu0 0.0
    %371 = vmatmul.mubr.f32.gmra.mrb[0].mxu0 %v257
    %v372 = vpop.f32.mrb[0].mxu0
    %v373 = vadd.f32 0.0, %v372
    %v374 = vpop.f32.mrb[0].mxu0
    %375 = vmatprep.mubr.f32.mxu0 0.0
    %376 = vmatmul.mubr.f32.gmra.mrb[0].mxu0 %v260
    %v377 = vpop.f32.mrb[0].mxu0
    %v378 = vadd.f32 0.0, %v377
    %v379 = vpop.f32.mrb[0].mxu0
    %380 = vmatprep.mubr.f32.mxu0 0.0
    %381 = vmatmul.mubr.f32.gmra.mrb[0].mxu0 %v263
    %v382 = vpop.f32.mrb[0].mxu0
    %v383 = vadd.f32 0.0, %v382
    %v384 = vpop.f32.mrb[0].mxu0
    %385 = vmatprep.mubr.f32.mxu0 0.0
    %386 = vmatmul.mubr.f32.gmra.mrb[0].mxu0 %v266
    %v387 = vpop.f32.mrb[0].mxu0
    %v388 = vadd.f32 0.0, %v387
    %v389 = vpop.f32.mrb[0].mxu0
    %390 = vmatprep.mubr.f32.mxu0 0.0
    %391 = vmatmul.mubr.f32.gmra.mrb[0].mxu0 %v269
    %v392 = vpop.f32.mrb[0].mxu0
    %v393 = vadd.f32 0.0, %v392
    %v394 = vpop.f32.mrb[0].mxu0
    %395 = vmatprep.mubr.f32.mxu0 0.0
    %396 = vmatmul.mubr.f32.gmra.mrb[0].mxu0 %v272
    %v397 = vpop.f32.mrb[0].mxu0
    %v398 = vadd.f32 0.0, %v397
    %v399 = vpop.f32.mrb[0].mxu0
    %400 = vmatprep.mubr.f32.mxu0 0.0
    %401 = vmatmul.mubr.f32.gmra.mrb[0].mxu0 %v275
    %v402 = vpop.f32.mrb[0].mxu0
    %v403 = vadd.f32 0.0, %v402
    %v404 = vpop.f32.mrb[0].mxu0
    %405 = vmatprep.mubr.f32.mxu0 0.0
    %406 = vmatmul.mubr.f32.gmra.mrb[0].mxu0 %v278
    %v407 = vpop.f32.mrb[0].mxu0
    %v408 = vadd.f32 0.0, %v407
    %v409 = vpop.f32.mrb[0].mxu0
    %410 = vmatprep.mubr.f32.mxu0 0.0
    %411 = vmatmul.mubr.f32.gmra.mrb[0].mxu0 %v281
    %v412 = vpop.f32.mrb[0].mxu0
    %v413 = vadd.f32 0.0, %v412
    %v414 = vpop.f32.mrb[0].mxu0
    %415 = vmatprep.mubr.f32.mxu0 0.0
    %416 = vmatmul.mubr.f32.gmra.mrb[0].mxu0 %v284
    %v417 = vpop.f32.mrb[0].mxu0
    %v418 = vadd.f32 0.0, %v417
    %v419 = vpop.f32.mrb[0].mxu0
    %420 = vmatprep.mubr.f32.mxu0 0.0
    %421 = vmatmul.mubr.f32.gmra.mrb[0].mxu0 %v287
    %v422 = vpop.f32.mrb[0].mxu0
    %v423 = vadd.f32 0.0, %v422
    %v424 = vpop.f32.mrb[0].mxu0
    %425 = vmatprep.mubr.f32.mxu0 0.0
    %426 = vmatmul.mubr.f32.gmra.mrb[0].mxu0 %v290
    %v427 = vpop.f32.mrb[0].mxu0
    %v428 = vadd.f32 0.0, %v427
    %v429 = vpop.f32.mrb[0].mxu0
    %430 = vmatprep.mubr.f32.mxu0 0.0
    %431 = vmatmul.mubr.f32.gmra.mrb[0].mxu0 %v293
    %v432 = vpop.f32.mrb[0].mxu0
    %v433 = vadd.f32 0.0, %v432
    %v434 = vpop.f32.mrb[0].mxu0
    %435 = vmatprep.mubr.f32.mxu0 0.0
    %436 = vmatmul.mubr.f32.gmra.mrb[0].mxu0 %v296
    %v437 = vpop.f32.mrb[0].mxu0
    %v438 = vadd.f32 0.0, %v437
    %v439 = vpop.f32.mrb[0].mxu0
    %440 = vmatprep.mubr.f32.mxu0 0.0
    %441 = vmatmul.mubr.f32.gmra.mrb[0].mxu0 %v299
    %v442 = vpop.f32.mrb[0].mxu0
    %v443 = vadd.f32 0.0, %v442
    %v444 = vpop.f32.mrb[0].mxu0
    %445 = vdwg.mxu0
    %v446 = vpack.c.bf16 %v373, %v368
    %v447 = vpack.c.bf16 %v383, %v378
    %v448 = vpack.c.bf16 %v393, %v388
    %v449 = vpack.c.bf16 %v403, %v398
    %v450 = vpack.c.bf16 %v413, %v408
    %v451 = vpack.c.bf16 %v423, %v418
    %v452 = vpack.c.bf16 %v433, %v428
    %v453 = vpack.c.bf16 %v443, %v438
    %454 = vst [vmem:[#allocation2] sm:$0xff] 0
    %455 = vst [vmem:[#allocation2 + $0x8] sm:$0xff] 0
    %456 = vst [vmem:[#allocation2 + $0x10] sm:$0xff] 0
    %457 = vst [vmem:[#allocation2 + $0x18] sm:$0xff] 0
    %458 = vst [vmem:[#allocation2 + $0x20] sm:$0xff] 0
    %459 = vst [vmem:[#allocation2 + $0x28] sm:$0xff] 0
    %460 = vst [vmem:[#allocation2 + $0x30] sm:$0xff] 0
    %461 = vst [vmem:[#allocation2 + $0x38] sm:$0xff] 0
    %v462 = vld [vmem:[%s1] sm:$0xf]
    %v463 = vld [vmem:[%s1 + $0x4] sm:$0xf]
    %v466 = vunpack.c.l.b16 %v462
    %v467 = vunpack.c.l.b16 %v463
    %v468 = vpack.c.b16 %v467, %v466
    %vm470 = vcmask 130048
    %471 = vst.msk [vmem:[#allocation2] sm:$0xff] %vm470, %v468
    %s472 = scalar_lea.vmem %s1, 8
    %v473 = vld [vmem:[%s472] sm:$0xf]
    %v474 = vld [vmem:[%s472 + $0x4] sm:$0xf]
    %v477 = vunpack.c.l.b16 %v473
    %v478 = vunpack.c.l.b16 %v474
    %v479 = vpack.c.b16 %v478, %v477
    %480 = vrot.lane.b32.xlu0 %v479, 16
    %v481 = vpop.permute.xlu0 %480
    %vm483 = vcmask 261248
    %484 = vst.msk [vmem:[#allocation2 + $0x8] sm:$0xff] %vm483, %v481
    %s485 = scalar_lea.vmem %s1, 16
    %v486 = vld [vmem:[%s485] sm:$0xf]
    %v487 = vld [vmem:[%s485 + $0x4] sm:$0xf]
    %v490 = vunpack.c.l.b16 %v486
    %v491 = vunpack.c.l.b16 %v487
    %v492 = vpack.c.b16 %v491, %v490
    %493 = vrot.lane.b32.xlu0 %v492, 32
    %v494 = vpop.permute.xlu0 %493
    %vm496 = vcmask 392448
    %497 = vst.msk [vmem:[#allocation2 + $0x10] sm:$0xff] %vm496, %v494
    %s498 = scalar_lea.vmem %s1, 24
    %v499 = vld [vmem:[%s498] sm:$0xf]
    %v500 = vld [vmem:[%s498 + $0x4] sm:$0xf]
    %v503 = vunpack.c.l.b16 %v499
    %v504 = vunpack.c.l.b16 %v500
    %v505 = vpack.c.b16 %v504, %v503
    %506 = vrot.lane.b32.xlu0 %v505, 48
    %v507 = vpop.permute.xlu0 %506
    %vm509 = vcmask 523648
    %510 = vst.msk [vmem:[#allocation2 + $0x18] sm:$0xff] %vm509, %v507
    %s511 = scalar_lea.vmem %s1, 32
    %v512 = vld [vmem:[%s511] sm:$0xf]
    %v513 = vld [vmem:[%s511 + $0x4] sm:$0xf]
    %v516 = vunpack.c.l.b16 %v512
    %v517 = vunpack.c.l.b16 %v513
    %v518 = vpack.c.b16 %v517, %v516
    %519 = vrot.lane.b32.xlu0 %v518, 64
    %v520 = vpop.permute.xlu0 %519
    %vm522 = vcmask 654848
    %523 = vst.msk [vmem:[#allocation2 + $0x20] sm:$0xff] %vm522, %v520
    %s524 = scalar_lea.vmem %s1, 40
    %v525 = vld [vmem:[%s524] sm:$0xf]
    %v526 = vld [vmem:[%s524 + $0x4] sm:$0xf]
    %v529 = vunpack.c.l.b16 %v525
    %v530 = vunpack.c.l.b16 %v526
    %v531 = vpack.c.b16 %v530, %v529
    %532 = vrot.lane.b32.xlu0 %v531, 80
    %v533 = vpop.permute.xlu0 %532
    %vm535 = vcmask 786048
    %536 = vst.msk [vmem:[#allocation2 + $0x28] sm:$0xff] %vm535, %v533
    %s537 = scalar_lea.vmem %s1, 48
    %v538 = vld [vmem:[%s537] sm:$0xf]
    %v539 = vld [vmem:[%s537 + $0x4] sm:$0xf]
    %v542 = vunpack.c.l.b16 %v538
    %v543 = vunpack.c.l.b16 %v539
    %v544 = vpack.c.b16 %v543, %v542
    %545 = vrot.lane.b32.xlu0 %v544, 96
    %v546 = vpop.permute.xlu0 %545
    %vm548 = vcmask 917248
    %549 = vst.msk [vmem:[#allocation2 + $0x30] sm:$0xff] %vm548, %v546
    %s550 = scalar_lea.vmem %s1, 56
    %v551 = vld [vmem:[%s550] sm:$0xf]
    %v552 = vld [vmem:[%s550 + $0x4] sm:$0xf]
    %v555 = vunpack.c.l.b16 %v551
    %v556 = vunpack.c.l.b16 %v552
    %v557 = vpack.c.b16 %v556, %v555
    %558 = vrot.lane.b32.xlu0 %v557, 112
    %v559 = vpop.permute.xlu0 %558
    %vm561 = vcmask 1048448
    %562 = vst.msk [vmem:[#allocation2 + $0x38] sm:$0xff] %vm561, %v559
    %v563 = vld [vmem:[#allocation2] sm:$0xff]
    %v564 = vld [vmem:[#allocation2 + $0x8] sm:$0xff]
    %v565 = vld [vmem:[#allocation2 + $0x10] sm:$0xff]
    %v566 = vld [vmem:[#allocation2 + $0x18] sm:$0xff]
    %v567 = vld [vmem:[#allocation2 + $0x20] sm:$0xff]
    %v568 = vld [vmem:[#allocation2 + $0x28] sm:$0xff]
    %v569 = vld [vmem:[#allocation2 + $0x30] sm:$0xff]
    %v570 = vld [vmem:[#allocation2 + $0x38] sm:$0xff]
    %571 = vrot.lane.b32.xlu0 %v236, 96
    %v572 = vpop.permute.xlu0 %571
    %573 = vrot.lane.b32.xlu0 %v237, 96
    %v574 = vpop.permute.xlu0 %573
    %575 = vrot.lane.b32.xlu0 %v238, 96
    %v576 = vpop.permute.xlu0 %575
    %577 = vrot.lane.b32.xlu0 %v239, 96
    %v578 = vpop.permute.xlu0 %577
    %579 = vrot.lane.b32.xlu0 %v240, 96
    %v580 = vpop.permute.xlu0 %579
    %581 = vrot.lane.b32.xlu0 %v241, 96
    %v582 = vpop.permute.xlu0 %581
    %583 = vrot.lane.b32.xlu0 %v242, 96
    %v584 = vpop.permute.xlu0 %583
    %585 = vrot.lane.b32.xlu0 %v243, 96
    %v586 = vpop.permute.xlu0 %585
    %587 = vrot.lane.b32.xlu0 %v244, 96
    %v588 = vpop.permute.xlu0 %587
    %589 = vrot.lane.b32.xlu0 %v245, 96
    %v590 = vpop.permute.xlu0 %589
    %591 = vrot.lane.b32.xlu0 %v246, 96
    %v592 = vpop.permute.xlu0 %591
    %593 = vrot.lane.b32.xlu0 %v247, 96
    %v594 = vpop.permute.xlu0 %593
    %595 = vrot.lane.b32.xlu0 %v248, 96
    %v596 = vpop.permute.xlu0 %595
    %597 = vrot.lane.b32.xlu0 %v249, 96
    %v598 = vpop.permute.xlu0 %597
    %599 = vrot.lane.b32.xlu0 %v250, 96
    %v600 = vpop.permute.xlu0 %599
    %601 = vrot.lane.b32.xlu0 %v251, 96
    %v602 = vpop.permute.xlu0 %601
    %619 = vmatprep.subr.bf16.mxu0 0
    %620 = vmatpush1.bf16.msra.mxu0 %v446
    %621 = vmatprep.subr.bf16.mxu0 0
    %622 = vmatpush1.bf16.msra.mxu0 %v447
    %623 = vmatprep.subr.bf16.mxu0 0
    %624 = vmatpush1.bf16.msra.mxu0 %v448
    %625 = vmatprep.subr.bf16.mxu0 0
    %626 = vmatpush1.bf16.msra.mxu0 %v449
    %627 = vmatprep.subr.bf16.mxu0 0
    %628 = vmatpush1.bf16.msra.mxu0 %v450
    %629 = vmatprep.subr.bf16.mxu0 0
    %630 = vmatpush1.bf16.msra.mxu0 %v451
    %631 = vmatprep.subr.bf16.mxu0 0
    %632 = vmatpush1.bf16.msra.mxu0 %v452
    %633 = vmatprep.subr.bf16.mxu0 0
    %634 = vmatpush1.bf16.msra.mxu0 %v453
    %635 = vmatprep.subr.bf16.mxu0 0
    %636 = vmatpush1.bf16.msra.mxu0 0
    %637 = vmatprep.subr.bf16.mxu0 0
    %638 = vmatpush1.bf16.msra.mxu0 0
    %639 = vmatprep.subr.bf16.mxu0 0
    %640 = vmatpush1.bf16.msra.mxu0 0
    %641 = vmatprep.subr.bf16.mxu0 0
    %642 = vmatpush1.bf16.msra.mxu0 0
    %643 = vmatprep.subr.bf16.mxu0 0
    %644 = vmatpush1.bf16.msra.mxu0 0
    %645 = vmatprep.subr.bf16.mxu0 0
    %646 = vmatpush1.bf16.msra.mxu0 0
    %647 = vmatprep.subr.bf16.mxu0 0
    %648 = vmatpush1.bf16.msra.mxu0 0
    %649 = vmatprep.subr.bf16.mxu0 0
    %650 = vmatpush1.bf16.msra.mxu0 0
    %651 = vmatprep.mubr.bf16.mxu0 0
    %652 = vmatmul.mubr.bf16.gmra.mrb[0].mxu0 %v563
    %v653 = vpop.f32.mrb[0].mxu0
    %v654 = vadd.f32 %v572, %v653
    %v655 = vpop.f32.mrb[0].mxu0
    %v656 = vpop.f32.mrb[0].mxu0
    %v657 = vadd.f32 %v574, %v656
    %v658 = vpop.f32.mrb[0].mxu0
    %659 = vmatprep.mubr.bf16.mxu0 0
    %660 = vmatmul.mubr.bf16.gmra.mrb[0].mxu0 %v564
    %v661 = vpop.f32.mrb[0].mxu0
    %v662 = vadd.f32 %v576, %v661
    %v663 = vpop.f32.mrb[0].mxu0
    %v664 = vpop.f32.mrb[0].mxu0
    %v665 = vadd.f32 %v578, %v664
    %v666 = vpop.f32.mrb[0].mxu0
    %667 = vmatprep.mubr.bf16.mxu0 0
    %668 = vmatmul.mubr.bf16.gmra.mrb[0].mxu0 %v565
    %v669 = vpop.f32.mrb[0].mxu0
    %v670 = vadd.f32 %v580, %v669
    %v671 = vpop.f32.mrb[0].mxu0
    %v672 = vpop.f32.mrb[0].mxu0
    %v673 = vadd.f32 %v582, %v672
    %v674 = vpop.f32.mrb[0].mxu0
    %675 = vmatprep.mubr.bf16.mxu0 0
    %676 = vmatmul.mubr.bf16.gmra.mrb[0].mxu0 %v566
    %v677 = vpop.f32.mrb[0].mxu0
    %v678 = vadd.f32 %v584, %v677
    %v679 = vpop.f32.mrb[0].mxu0
    %v680 = vpop.f32.mrb[0].mxu0
    %v681 = vadd.f32 %v586, %v680
    %v682 = vpop.f32.mrb[0].mxu0
    %683 = vmatprep.mubr.bf16.mxu0 0
    %684 = vmatmul.mubr.bf16.gmra.mrb[0].mxu0 %v567
    %v685 = vpop.f32.mrb[0].mxu0
    %v686 = vadd.f32 %v588, %v685
    %v687 = vpop.f32.mrb[0].mxu0
    %v688 = vpop.f32.mrb[0].mxu0
    %v689 = vadd.f32 %v590, %v688
    %v690 = vpop.f32.mrb[0].mxu0
    %691 = vmatprep.mubr.bf16.mxu0 0
    %692 = vmatmul.mubr.bf16.gmra.mrb[0].mxu0 %v568
    %v693 = vpop.f32.mrb[0].mxu0
    %v694 = vadd.f32 %v592, %v693
    %v695 = vpop.f32.mrb[0].mxu0
    %v696 = vpop.f32.mrb[0].mxu0
    %v697 = vadd.f32 %v594, %v696
    %v698 = vpop.f32.mrb[0].mxu0
    %699 = vmatprep.mubr.bf16.mxu0 0
    %700 = vmatmul.mubr.bf16.gmra.mrb[0].mxu0 %v569
    %v701 = vpop.f32.mrb[0].mxu0
    %v702 = vadd.f32 %v596, %v701
    %v703 = vpop.f32.mrb[0].mxu0
    %v704 = vpop.f32.mrb[0].mxu0
    %v705 = vadd.f32 %v598, %v704
    %v706 = vpop.f32.mrb[0].mxu0
    %707 = vmatprep.mubr.bf16.mxu0 0
    %708 = vmatmul.mubr.bf16.gmra.mrb[0].mxu0 %v570
    %v709 = vpop.f32.mrb[0].mxu0
    %v710 = vadd.f32 %v600, %v709
    %v711 = vpop.f32.mrb[0].mxu0
    %v712 = vpop.f32.mrb[0].mxu0
    %v713 = vadd.f32 %v602, %v712
    %v714 = vpop.f32.mrb[0].mxu0
    %715 = vdwg.mxu0
    %v716 = vmax.f32 %v654, 0.0
    %v717 = vmax.f32 %v657, 0.0
    %v718 = vmax.f32 %v662, 0.0
    %v719 = vmax.f32 %v665, 0.0
    %v720 = vmax.f32 %v670, 0.0
    %v721 = vmax.f32 %v673, 0.0
    %v722 = vmax.f32 %v678, 0.0
    %v723 = vmax.f32 %v681, 0.0
    %v724 = vmax.f32 %v686, 0.0
    %v725 = vmax.f32 %v689, 0.0
    %v726 = vmax.f32 %v694, 0.0
    %v727 = vmax.f32 %v697, 0.0
    %v728 = vmax.f32 %v702, 0.0
    %v729 = vmax.f32 %v705, 0.0
    %v730 = vmax.f32 %v710, 0.0
    %v731 = vmax.f32 %v713, 0.0
    %v732 = vadd.f32 %v236, %v716
    %v733 = vadd.f32 %v237, %v717
    %v734 = vadd.f32 %v238, %v718
    %v735 = vadd.f32 %v239, %v719
    %v736 = vadd.f32 %v240, %v720
    %v737 = vadd.f32 %v241, %v721
    %v738 = vadd.f32 %v242, %v722
    %v739 = vadd.f32 %v243, %v723
    %v740 = vadd.f32 %v244, %v724
    %v741 = vadd.f32 %v245, %v725
    %v742 = vadd.f32 %v246, %v726
    %v743 = vadd.f32 %v247, %v727
    %v744 = vadd.f32 %v248, %v728
    %v745 = vadd.f32 %v249, %v729
    %v746 = vadd.f32 %v250, %v730
    %v747 = vadd.f32 %v251, %v731
    %752 = vrot.lane.b32.xlu0 %v37, 96
    %v753 = vpop.permute.xlu0 %752
    %754 = vrot.lane.b32.xlu0 %v38, 96
    %v755 = vpop.permute.xlu0 %754
    %756 = vrot.lane.b32.xlu0 %v39, 96
    %v757 = vpop.permute.xlu0 %756
    %758 = vrot.lane.b32.xlu0 %v40, 96
    %v759 = vpop.permute.xlu0 %758
    %v765 = vsel %vm252, %v732, 0
    %v768 = vsel %vm252, %v733, 0
    %v771 = vsel %vm252, %v734, 0
    %v774 = vsel %vm252, %v735, 0
    %v777 = vsel %vm252, %v736, 0
    %v780 = vsel %vm252, %v737, 0
    %v783 = vsel %vm252, %v738, 0
    %v786 = vsel %vm252, %v739, 0
    %v789 = vsel %vm252, %v740, 0
    %v792 = vsel %vm252, %v741, 0
    %v795 = vsel %vm252, %v742, 0
    %v798 = vsel %vm252, %v743, 0
    %v801 = vsel %vm252, %v744, 0
    %v804 = vsel %vm252, %v745, 0
    %v807 = vsel %vm252, %v746, 0
    %v810 = vsel %vm252, %v747, 0
    %812 = vmatprep.subr.mxu0 0.0
    %813 = vmatpush1.msra.mxu0 %v753
    %814 = vmatprep.subr.mxu0 0.0
    %815 = vmatpush1.msra.mxu0 %v755
    %816 = vmatprep.subr.mxu0 0.0
    %817 = vmatpush1.msra.mxu0 %v757
    %818 = vmatprep.subr.mxu0 0.0
    %819 = vmatpush1.msra.mxu0 %v759
    %820 = vmatprep.subr.mxu0 0.0
    %821 = vmatpush1.msra.mxu0 0.0
    %822 = vmatprep.subr.mxu0 0.0
    %823 = vmatpush1.msra.mxu0 0.0
    %824 = vmatprep.subr.mxu0 0.0
    %825 = vmatpush1.msra.mxu0 0.0
    %826 = vmatprep.subr.mxu0 0.0
    %827 = vmatpush1.msra.mxu0 0.0
    %828 = vmatprep.subr.mxu0 0.0
    %829 = vmatpush1.msra.mxu0 0.0
    %830 = vmatprep.subr.mxu0 0.0
    %831 = vmatpush1.msra.mxu0 0.0
    %832 = vmatprep.subr.mxu0 0.0
    %833 = vmatpush1.msra.mxu0 0.0
    %834 = vmatprep.subr.mxu0 0.0
    %835 = vmatpush1.msra.mxu0 0.0
    %836 = vmatprep.subr.mxu0 0.0
    %837 = vmatpush1.msra.mxu0 0.0
    %838 = vmatprep.subr.mxu0 0.0
    %839 = vmatpush1.msra.mxu0 0.0
    %840 = vmatprep.subr.mxu0 0.0
    %841 = vmatpush1.msra.mxu0 0.0
    %842 = vmatprep.subr.mxu0 0.0
    %843 = vmatpush1.msra.mxu0 0.0
    %844 = vmatprep.subr.mxu0 0.0
    %845 = vmatpush1.msra.mxu0 0.0
    %846 = vmatprep.subr.mxu0 0.0
    %847 = vmatpush1.msra.mxu0 0.0
    %848 = vmatprep.subr.mxu0 0.0
    %849 = vmatpush1.msra.mxu0 0.0
    %850 = vmatprep.subr.mxu0 0.0
    %851 = vmatpush1.msra.mxu0 0.0
    %852 = vmatprep.subr.mxu0 0.0
    %853 = vmatpush1.msra.mxu0 0.0
    %854 = vmatprep.subr.mxu0 0.0
    %855 = vmatpush1.msra.mxu0 0.0
    %856 = vmatprep.subr.mxu0 0.0
    %857 = vmatpush1.msra.mxu0 0.0
    %858 = vmatprep.subr.mxu0 0.0
    %859 = vmatpush1.msra.mxu0 0.0
    %860 = vmatprep.subr.mxu0 0.0
    %861 = vmatpush1.msra.mxu0 0.0
    %862 = vmatprep.subr.mxu0 0.0
    %863 = vmatpush1.msra.mxu0 0.0
    %864 = vmatprep.subr.mxu0 0.0
    %865 = vmatpush1.msra.mxu0 0.0
    %866 = vmatprep.subr.mxu0 0.0
    %867 = vmatpush1.msra.mxu0 0.0
    %868 = vmatprep.subr.mxu0 0.0
    %869 = vmatpush1.msra.mxu0 0.0
    %870 = vmatprep.subr.mxu0 0.0
    %871 = vmatpush1.msra.mxu0 0.0
    %872 = vmatprep.subr.mxu0 0.0
    %873 = vmatpush1.msra.mxu0 0.0
    %874 = vmatprep.subr.mxu0 0.0
    %875 = vmatpush1.msra.mxu0 0.0
    %876 = vmatprep.mubr.f32.mxu0 0.0
    %877 = vmatmul.mubr.f32.gmra.mrb[0].mxu0 %v765
    %v878 = vpop.f32.mrb[0].mxu0
    %v879 = vadd.f32 0.0, %v878
    %v880 = vpop.f32.mrb[0].mxu0
    %881 = vmatprep.mubr.f32.mxu0 0.0
    %882 = vmatmul.mubr.f32.gmra.mrb[0].mxu0 %v768
    %v883 = vpop.f32.mrb[0].mxu0
    %v884 = vadd.f32 0.0, %v883
    %v885 = vpop.f32.mrb[0].mxu0
    %886 = vmatprep.mubr.f32.mxu0 0.0
    %887 = vmatmul.mubr.f32.gmra.mrb[0].mxu0 %v771
    %v888 = vpop.f32.mrb[0].mxu0
    %v889 = vadd.f32 0.0, %v888
    %v890 = vpop.f32.mrb[0].mxu0
    %891 = vmatprep.mubr.f32.mxu0 0.0
    %892 = vmatmul.mubr.f32.gmra.mrb[0].mxu0 %v774
    %v893 = vpop.f32.mrb[0].mxu0
    %v894 = vadd.f32 0.0, %v893
    %v895 = vpop.f32.mrb[0].mxu0
    %896 = vmatprep.mubr.f32.mxu0 0.0
    %897 = vmatmul.mubr.f32.gmra.mrb[0].mxu0 %v777
    %v898 = vpop.f32.mrb[0].mxu0
    %v899 = vadd.f32 0.0, %v898
    %v900 = vpop.f32.mrb[0].mxu0
    %901 = vmatprep.mubr.f32.mxu0 0.0
    %902 = vmatmul.mubr.f32.gmra.mrb[0].mxu0 %v780
    %v903 = vpop.f32.mrb[0].mxu0
    %v904 = vadd.f32 0.0, %v903
    %v905 = vpop.f32.mrb[0].mxu0
    %906 = vmatprep.mubr.f32.mxu0 0.0
    %907 = vmatmul.mubr.f32.gmra.mrb[0].mxu0 %v783
    %v908 = vpop.f32.mrb[0].mxu0
    %v909 = vadd.f32 0.0, %v908
    %v910 = vpop.f32.mrb[0].mxu0
    %911 = vmatprep.mubr.f32.mxu0 0.0
    %912 = vmatmul.mubr.f32.gmra.mrb[0].mxu0 %v786
    %v913 = vpop.f32.mrb[0].mxu0
    %v914 = vadd.f32 0.0, %v913
    %v915 = vpop.f32.mrb[0].mxu0
    %916 = vmatprep.mubr.f32.mxu0 0.0
    %917 = vmatmul.mubr.f32.gmra.mrb[0].mxu0 %v789
    %v918 = vpop.f32.mrb[0].mxu0
    %v919 = vadd.f32 0.0, %v918
    %v920 = vpop.f32.mrb[0].mxu0
    %921 = vmatprep.mubr.f32.mxu0 0.0
    %922 = vmatmul.mubr.f32.gmra.mrb[0].mxu0 %v792
    %v923 = vpop.f32.mrb[0].mxu0
    %v924 = vadd.f32 0.0, %v923
    %v925 = vpop.f32.mrb[0].mxu0
    %926 = vmatprep.mubr.f32.mxu0 0.0
    %927 = vmatmul.mubr.f32.gmra.mrb[0].mxu0 %v795
    %v928 = vpop.f32.mrb[0].mxu0
    %v929 = vadd.f32 0.0, %v928
    %v930 = vpop.f32.mrb[0].mxu0
    %931 = vmatprep.mubr.f32.mxu0 0.0
    %932 = vmatmul.mubr.f32.gmra.mrb[0].mxu0 %v798
    %v933 = vpop.f32.mrb[0].mxu0
    %v934 = vadd.f32 0.0, %v933
    %v935 = vpop.f32.mrb[0].mxu0
    %936 = vmatprep.mubr.f32.mxu0 0.0
    %937 = vmatmul.mubr.f32.gmra.mrb[0].mxu0 %v801
    %v938 = vpop.f32.mrb[0].mxu0
    %v939 = vadd.f32 0.0, %v938
    %v940 = vpop.f32.mrb[0].mxu0
    %941 = vmatprep.mubr.f32.mxu0 0.0
    %942 = vmatmul.mubr.f32.gmra.mrb[0].mxu0 %v804
    %v943 = vpop.f32.mrb[0].mxu0
    %v944 = vadd.f32 0.0, %v943
    %v945 = vpop.f32.mrb[0].mxu0
    %946 = vmatprep.mubr.f32.mxu0 0.0
    %947 = vmatmul.mubr.f32.gmra.mrb[0].mxu0 %v807
    %v948 = vpop.f32.mrb[0].mxu0
    %v949 = vadd.f32 0.0, %v948
    %v950 = vpop.f32.mrb[0].mxu0
    %951 = vmatprep.mubr.f32.mxu0 0.0
    %952 = vmatmul.mubr.f32.gmra.mrb[0].mxu0 %v810
    %v953 = vpop.f32.mrb[0].mxu0
    %v954 = vadd.f32 0.0, %v953
    %v955 = vpop.f32.mrb[0].mxu0
    %956 = vdwg.mxu0
    %v957 = vpack.c.bf16 %v884, %v879
    %v958 = vpack.c.bf16 %v894, %v889
    %v959 = vpack.c.bf16 %v904, %v899
    %v960 = vpack.c.bf16 %v914, %v909
    %v961 = vpack.c.bf16 %v924, %v919
    %v962 = vpack.c.bf16 %v934, %v929
    %v963 = vpack.c.bf16 %v944, %v939
    %v964 = vpack.c.bf16 %v954, %v949
    %965 = vrot.lane.b32.xlu0 %v236, 64
    %v966 = vpop.permute.xlu0 %965
    %967 = vrot.lane.b32.xlu0 %v237, 64
    %v968 = vpop.permute.xlu0 %967
    %969 = vrot.lane.b32.xlu0 %v238, 64
    %v970 = vpop.permute.xlu0 %969
    %971 = vrot.lane.b32.xlu0 %v239, 64
    %v972 = vpop.permute.xlu0 %971
    %973 = vrot.lane.b32.xlu0 %v240, 64
    %v974 = vpop.permute.xlu0 %973
    %975 = vrot.lane.b32.xlu0 %v241, 64
    %v976 = vpop.permute.xlu0 %975
    %977 = vrot.lane.b32.xlu0 %v242, 64
    %v978 = vpop.permute.xlu0 %977
    %979 = vrot.lane.b32.xlu0 %v243, 64
    %v980 = vpop.permute.xlu0 %979
    %981 = vrot.lane.b32.xlu0 %v244, 64
    %v982 = vpop.permute.xlu0 %981
    %983 = vrot.lane.b32.xlu0 %v245, 64
    %v984 = vpop.permute.xlu0 %983
    %985 = vrot.lane.b32.xlu0 %v246, 64
    %v986 = vpop.permute.xlu0 %985
    %987 = vrot.lane.b32.xlu0 %v247, 64
    %v988 = vpop.permute.xlu0 %987
    %989 = vrot.lane.b32.xlu0 %v248, 64
    %v990 = vpop.permute.xlu0 %989
    %991 = vrot.lane.b32.xlu0 %v249, 64
    %v992 = vpop.permute.xlu0 %991
    %993 = vrot.lane.b32.xlu0 %v250, 64
    %v994 = vpop.permute.xlu0 %993
    %995 = vrot.lane.b32.xlu0 %v251, 64
    %v996 = vpop.permute.xlu0 %995
    %1013 = vmatprep.subr.bf16.mxu0 0
    %1014 = vmatpush1.bf16.msra.mxu0 %v957
    %1015 = vmatprep.subr.bf16.mxu0 0
    %1016 = vmatpush1.bf16.msra.mxu0 %v958
    %1017 = vmatprep.subr.bf16.mxu0 0
    %1018 = vmatpush1.bf16.msra.mxu0 %v959
    %1019 = vmatprep.subr.bf16.mxu0 0
    %1020 = vmatpush1.bf16.msra.mxu0 %v960
    %1021 = vmatprep.subr.bf16.mxu0 0
    %1022 = vmatpush1.bf16.msra.mxu0 %v961
    %1023 = vmatprep.subr.bf16.mxu0 0
    %1024 = vmatpush1.bf16.msra.mxu0 %v962
    %1025 = vmatprep.subr.bf16.mxu0 0
    %1026 = vmatpush1.bf16.msra.mxu0 %v963
    %1027 = vmatprep.subr.bf16.mxu0 0
    %1028 = vmatpush1.bf16.msra.mxu0 %v964
    %1029 = vmatprep.subr.bf16.mxu0 0
    %1030 = vmatpush1.bf16.msra.mxu0 0
    %1031 = vmatprep.subr.bf16.mxu0 0
    %1032 = vmatpush1.bf16.msra.mxu0 0
    %1033 = vmatprep.subr.bf16.mxu0 0
    %1034 = vmatpush1.bf16.msra.mxu0 0
    %1035 = vmatprep.subr.bf16.mxu0 0
    %1036 = vmatpush1.bf16.msra.mxu0 0
    %1037 = vmatprep.subr.bf16.mxu0 0
    %1038 = vmatpush1.bf16.msra.mxu0 0
    %1039 = vmatprep.subr.bf16.mxu0 0
    %1040 = vmatpush1.bf16.msra.mxu0 0
    %1041 = vmatprep.subr.bf16.mxu0 0
    %1042 = vmatpush1.bf16.msra.mxu0 0
    %1043 = vmatprep.subr.bf16.mxu0 0
    %1044 = vmatpush1.bf16.msra.mxu0 0
    %1045 = vmatprep.mubr.bf16.mxu0 0
    %1046 = vmatmul.mubr.bf16.gmra.mrb[0].mxu0 %v563
    %v1047 = vpop.f32.mrb[0].mxu0
    %v1048 = vadd.f32 %v966, %v1047
    %v1049 = vpop.f32.mrb[0].mxu0
    %v1050 = vpop.f32.mrb[0].mxu0
    %v1051 = vadd.f32 %v968, %v1050
    %v1052 = vpop.f32.mrb[0].mxu0
    %1053 = vmatprep.mubr.bf16.mxu0 0
    %1054 = vmatmul.mubr.bf16.gmra.mrb[0].mxu0 %v564
    %v1055 = vpop.f32.mrb[0].mxu0
    %v1056 = vadd.f32 %v970, %v1055
    %v1057 = vpop.f32.mrb[0].mxu0
    %v1058 = vpop.f32.mrb[0].mxu0
    %v1059 = vadd.f32 %v972, %v1058
    %v1060 = vpop.f32.mrb[0].mxu0
    %1061 = vmatprep.mubr.bf16.mxu0 0
    %1062 = vmatmul.mubr.bf16.gmra.mrb[0].mxu0 %v565
    %v1063 = vpop.f32.mrb[0].mxu0
    %v1064 = vadd.f32 %v974, %v1063
    %v1065 = vpop.f32.mrb[0].mxu0
    %v1066 = vpop.f32.mrb[0].mxu0
    %v1067 = vadd.f32 %v976, %v1066
    %v1068 = vpop.f32.mrb[0].mxu0
    %1069 = vmatprep.mubr.bf16.mxu0 0
    %1070 = vmatmul.mubr.bf16.gmra.mrb[0].mxu0 %v566
    %v1071 = vpop.f32.mrb[0].mxu0
    %v1072 = vadd.f32 %v978, %v1071
    %v1073 = vpop.f32.mrb[0].mxu0
    %v1074 = vpop.f32.mrb[0].mxu0
    %v1075 = vadd.f32 %v980, %v1074
    %v1076 = vpop.f32.mrb[0].mxu0
    %1077 = vmatprep.mubr.bf16.mxu0 0
    %1078 = vmatmul.mubr.bf16.gmra.mrb[0].mxu0 %v567
    %v1079 = vpop.f32.mrb[0].mxu0
    %v1080 = vadd.f32 %v982, %v1079
    %v1081 = vpop.f32.mrb[0].mxu0
    %v1082 = vpop.f32.mrb[0].mxu0
    %v1083 = vadd.f32 %v984, %v1082
    %v1084 = vpop.f32.mrb[0].mxu0
    %1085 = vmatprep.mubr.bf16.mxu0 0
    %1086 = vmatmul.mubr.bf16.gmra.mrb[0].mxu0 %v568
    %v1087 = vpop.f32.mrb[0].mxu0
    %v1088 = vadd.f32 %v986, %v1087
    %v1089 = vpop.f32.mrb[0].mxu0
    %v1090 = vpop.f32.mrb[0].mxu0
    %v1091 = vadd.f32 %v988, %v1090
    %v1092 = vpop.f32.mrb[0].mxu0
    %1093 = vmatprep.mubr.bf16.mxu0 0
    %1094 = vmatmul.mubr.bf16.gmra.mrb[0].mxu0 %v569
    %v1095 = vpop.f32.mrb[0].mxu0
    %v1096 = vadd.f32 %v990, %v1095
    %v1097 = vpop.f32.mrb[0].mxu0
    %v1098 = vpop.f32.mrb[0].mxu0
    %v1099 = vadd.f32 %v992, %v1098
    %v1100 = vpop.f32.mrb[0].mxu0
    %1101 = vmatprep.mubr.bf16.mxu0 0
    %1102 = vmatmul.mubr.bf16.gmra.mrb[0].mxu0 %v570
    %v1103 = vpop.f32.mrb[0].mxu0
    %v1104 = vadd.f32 %v994, %v1103
    %v1105 = vpop.f32.mrb[0].mxu0
    %v1106 = vpop.f32.mrb[0].mxu0
    %v1107 = vadd.f32 %v996, %v1106
    %v1108 = vpop.f32.mrb[0].mxu0
    %1109 = vdwg.mxu0
    %v1110 = vmax.f32 %v1048, 0.0
    %v1111 = vmax.f32 %v1051, 0.0
    %v1112 = vmax.f32 %v1056, 0.0
    %v1113 = vmax.f32 %v1059, 0.0
    %v1114 = vmax.f32 %v1064, 0.0
    %v1115 = vmax.f32 %v1067, 0.0
    %v1116 = vmax.f32 %v1072, 0.0
    %v1117 = vmax.f32 %v1075, 0.0
    %v1118 = vmax.f32 %v1080, 0.0
    %v1119 = vmax.f32 %v1083, 0.0
    %v1120 = vmax.f32 %v1088, 0.0
    %v1121 = vmax.f32 %v1091, 0.0
    %v1122 = vmax.f32 %v1096, 0.0
    %v1123 = vmax.f32 %v1099, 0.0
    %v1124 = vmax.f32 %v1104, 0.0
    %v1125 = vmax.f32 %v1107, 0.0
    %v1126 = vadd.f32 %v732, %v1110
    %v1127 = vadd.f32 %v733, %v1111
    %v1128 = vadd.f32 %v734, %v1112
    %v1129 = vadd.f32 %v735, %v1113
    %v1130 = vadd.f32 %v736, %v1114
    %v1131 = vadd.f32 %v737, %v1115
    %v1132 = vadd.f32 %v738, %v1116
    %v1133 = vadd.f32 %v739, %v1117
    %v1134 = vadd.f32 %v740, %v1118
    %v1135 = vadd.f32 %v741, %v1119
    %v1136 = vadd.f32 %v742, %v1120
    %v1137 = vadd.f32 %v743, %v1121
    %v1138 = vadd.f32 %v744, %v1122
    %v1139 = vadd.f32 %v745, %v1123
    %v1140 = vadd.f32 %v746, %v1124
    %v1141 = vadd.f32 %v747, %v1125
    %v1142 = vsel %vm252, %v1126, 0.0
    %v1143 = vsel %vm252, %v1127, 0.0
    %v1144 = vadd.f32 %v1142, %v1143
    %v1145 = vrot.slane %v1144, 4
    %v1146 = vadd.f32 %v1144, %v1145
    %v1147 = vrot.slane %v1146, 2
    %v1148 = vadd.f32 %v1146, %v1147
    %v1149 = vrot.slane %v1148, 1
    %v1150 = vadd.f32 %v1148, %v1149
    %v1151 = vsel %vm252, %v1128, 0.0
    %v1152 = vsel %vm252, %v1129, 0.0
    %v1153 = vadd.f32 %v1151, %v1152
    %v1154 = vrot.slane %v1153, 4
    %v1155 = vadd.f32 %v1153, %v1154
    %v1156 = vrot.slane %v1155, 2
    %v1157 = vadd.f32 %v1155, %v1156
    %v1158 = vrot.slane %v1157, 1
    %v1159 = vadd.f32 %v1157, %v1158
    %v1160 = vsel %vm252, %v1130, 0.0
    %v1161 = vsel %vm252, %v1131, 0.0
    %v1162 = vadd.f32 %v1160, %v1161
    %v1163 = vrot.slane %v1162, 4
    %v1164 = vadd.f32 %v1162, %v1163
    %v1165 = vrot.slane %v1164, 2
    %v1166 = vadd.f32 %v1164, %v1165
    %v1167 = vrot.slane %v1166, 1
    %v1168 = vadd.f32 %v1166, %v1167
    %v1169 = vsel %vm252, %v1132, 0.0
    %v1170 = vsel %vm252, %v1133, 0.0
    %v1171 = vadd.f32 %v1169, %v1170
    %v1172 = vrot.slane %v1171, 4
    %v1173 = vadd.f32 %v1171, %v1172
    %v1174 = vrot.slane %v1173, 2
    %v1175 = vadd.f32 %v1173, %v1174
    %v1176 = vrot.slane %v1175, 1
    %v1177 = vadd.f32 %v1175, %v1176
    %v1178 = vsel %vm252, %v1134, 0.0
    %v1179 = vsel %vm252, %v1135, 0.0
    %v1180 = vadd.f32 %v1178, %v1179
    %v1181 = vrot.slane %v1180, 4
    %v1182 = vadd.f32 %v1180, %v1181
    %v1183 = vrot.slane %v1182, 2
    %v1184 = vadd.f32 %v1182, %v1183
    %v1185 = vrot.slane %v1184, 1
    %v1186 = vadd.f32 %v1184, %v1185
    %v1187 = vsel %vm252, %v1136, 0.0
    %v1188 = vsel %vm252, %v1137, 0.0
    %v1189 = vadd.f32 %v1187, %v1188
    %v1190 = vrot.slane %v1189, 4
    %v1191 = vadd.f32 %v1189, %v1190
    %v1192 = vrot.slane %v1191, 2
    %v1193 = vadd.f32 %v1191, %v1192
    %v1194 = vrot.slane %v1193, 1
    %v1195 = vadd.f32 %v1193, %v1194
    %v1196 = vsel %vm252, %v1138, 0.0
    %v1197 = vsel %vm252, %v1139, 0.0
    %v1198 = vadd.f32 %v1196, %v1197
    %v1199 = vrot.slane %v1198, 4
    %v1200 = vadd.f32 %v1198, %v1199
    %v1201 = vrot.slane %v1200, 2
    %v1202 = vadd.f32 %v1200, %v1201
    %v1203 = vrot.slane %v1202, 1
    %v1204 = vadd.f32 %v1202, %v1203
    %v1205 = vsel %vm252, %v1140, 0.0
    %v1206 = vsel %vm252, %v1141, 0.0
    %v1207 = vadd.f32 %v1205, %v1206
    %v1208 = vrot.slane %v1207, 4
    %v1209 = vadd.f32 %v1207, %v1208
    %v1210 = vrot.slane %v1209, 2
    %v1211 = vadd.f32 %v1209, %v1210
    %v1212 = vrot.slane %v1211, 1
    %v1213 = vadd.f32 %v1211, %v1212
    %v1214 = vrcp.pop 16.0
    %v1215 = vmul.f32 %v1150, %v1214
    %v1216 = vmul.f32 %v1159, %v1214
    %v1217 = vmul.f32 %v1168, %v1214
    %v1218 = vmul.f32 %v1177, %v1214
    %v1219 = vmul.f32 %v1186, %v1214
    %v1220 = vmul.f32 %v1195, %v1214
    %v1221 = vmul.f32 %v1204, %v1214
    %v1222 = vmul.f32 %v1213, %v1214
    %vm1231 = vcmask 1041409
    %v1232 = vsel %vm1231, %v1216, %v1215
    %vm1233 = vcmask 1042434
    %v1234 = vsel %vm1233, %v1217, %v1232
    %vm1235 = vcmask 1043459
    %v1236 = vsel %vm1235, %v1218, %v1234
    %vm1237 = vcmask 1044484
    %v1238 = vsel %vm1237, %v1219, %v1236
    %vm1239 = vcmask 1045509
    %v1240 = vsel %vm1239, %v1220, %v1238
    %vm1241 = vcmask 1046534
    %v1242 = vsel %vm1241, %v1221, %v1240
    %vm1243 = vcmask 1047559
    %v1244 = vsel %vm1243, %v1222, %v1242
    %1245 = vrot.lane.b32.xlu0 %v37, 64
    %v1246 = vpop.permute.xlu0 %1245
    %1247 = vrot.lane.b32.xlu0 %v38, 64
    %v1248 = vpop.permute.xlu0 %1247
    %1249 = vrot.lane.b32.xlu0 %v39, 64
    %v1250 = vpop.permute.xlu0 %1249
    %1251 = vrot.lane.b32.xlu0 %v40, 64
    %v1252 = vpop.permute.xlu0 %1251
    %1257 = vrot.lane.b32.xlu0 %v234, 32
    %v1258 = vpop.permute.xlu0 %1257
    %v1260 = vsel %vm252, %v1244, 0
    %1262 = vmatprep.subr.mxu0 0.0
    %1263 = vmatpush1.msra.mxu0 %v1246
    %1264 = vmatprep.subr.mxu0 0.0
    %1265 = vmatpush1.msra.mxu0 %v1248
    %1266 = vmatprep.subr.mxu0 0.0
    %1267 = vmatpush1.msra.mxu0 %v1250
    %1268 = vmatprep.subr.mxu0 0.0
    %1269 = vmatpush1.msra.mxu0 %v1252
    %1270 = vmatprep.subr.mxu0 0.0
    %1271 = vmatpush1.msra.mxu0 0.0
    %1272 = vmatprep.subr.mxu0 0.0
    %1273 = vmatpush1.msra.mxu0 0.0
    %1274 = vmatprep.subr.mxu0 0.0
    %1275 = vmatpush1.msra.mxu0 0.0
    %1276 = vmatprep.subr.mxu0 0.0
    %1277 = vmatpush1.msra.mxu0 0.0
    %1278 = vmatprep.subr.mxu0 0.0
    %1279 = vmatpush1.msra.mxu0 0.0
    %1280 = vmatprep.subr.mxu0 0.0
    %1281 = vmatpush1.msra.mxu0 0.0
    %1282 = vmatprep.subr.mxu0 0.0
    %1283 = vmatpush1.msra.mxu0 0.0
    %1284 = vmatprep.subr.mxu0 0.0
    %1285 = vmatpush1.msra.mxu0 0.0
    %1286 = vmatprep.subr.mxu0 0.0
    %1287 = vmatpush1.msra.mxu0 0.0
    %1288 = vmatprep.subr.mxu0 0.0
    %1289 = vmatpush1.msra.mxu0 0.0
    %1290 = vmatprep.subr.mxu0 0.0
    %1291 = vmatpush1.msra.mxu0 0.0
    %1292 = vmatprep.subr.mxu0 0.0
    %1293 = vmatpush1.msra.mxu0 0.0
    %1294 = vmatprep.subr.mxu0 0.0
    %1295 = vmatpush1.msra.mxu0 0.0
    %1296 = vmatprep.subr.mxu0 0.0
    %1297 = vmatpush1.msra.mxu0 0.0
    %1298 = vmatprep.subr.mxu0 0.0
    %1299 = vmatpush1.msra.mxu0 0.0
    %1300 = vmatprep.subr.mxu0 0.0
    %1301 = vmatpush1.msra.mxu0 0.0
    %1302 = vmatprep.subr.mxu0 0.0
    %1303 = vmatpush1.msra.mxu0 0.0
    %1304 = vmatprep.subr.mxu0 0.0
    %1305 = vmatpush1.msra.mxu0 0.0
    %1306 = vmatprep.subr.mxu0 0.0
    %1307 = vmatpush1.msra.mxu0 0.0
    %1308 = vmatprep.subr.mxu0 0.0
    %1309 = vmatpush1.msra.mxu0 0.0
    %1310 = vmatprep.subr.mxu0 0.0
    %1311 = vmatpush1.msra.mxu0 0.0
    %1312 = vmatprep.subr.mxu0 0.0
    %1313 = vmatpush1.msra.mxu0 0.0
    %1314 = vmatprep.subr.mxu0 0.0
    %1315 = vmatpush1.msra.mxu0 0.0
    %1316 = vmatprep.subr.mxu0 0.0
    %1317 = vmatpush1.msra.mxu0 0.0
    %1318 = vmatprep.subr.mxu0 0.0
    %1319 = vmatpush1.msra.mxu0 0.0
    %1320 = vmatprep.subr.mxu0 0.0
    %1321 = vmatpush1.msra.mxu0 0.0
    %1322 = vmatprep.subr.mxu0 0.0
    %1323 = vmatpush1.msra.mxu0 0.0
    %1324 = vmatprep.subr.mxu0 0.0
    %1325 = vmatpush1.msra.mxu0 0.0
    %1326 = vmatprep.mubr.f32.mxu0 0.0
    %1327 = vmatmul.mubr.f32.gmra.mrb[0].mxu0 %v1260
    %v1328 = vpop.f32.mrb[0].mxu0
    %v1329 = vadd.f32 %v1258, %v1328
    %v1330 = vpop.f32.mrb[0].mxu0
    %1331 = vdwg.mxu0
    %v1332 = vmax.f32 %v1329, 0.0
    %v1333 = vld [vmem:[%s4] sm:$0xff]
    %v1334 = vld [vmem:[%s4 + $0x8] sm:$0xff]
    %v1335 = vld [vmem:[%s4 + $0x10] sm:$0xff]
    %v1336 = vld [vmem:[%s4 + $0x18] sm:$0xff]
    %v1337 = vld [vmem:[%s7] sm:$0x1]
    %v1339 = vlaneseq
    %v1340 = vshrl.u32 %v1339, 7
    %v1341 = vsub.s32 0, %v1340
    %v1342 = vrot.slane %v1337, %v1341
    %v1345 = vsel %vm252, %v1332, 0
    %1347 = vmatprep.subr.mxu0 0.0
    %1348 = vmatpush1.msra.mxu0 %v1333
    %1349 = vmatprep.subr.mxu0 0.0
    %1350 = vmatpush1.msra.mxu0 %v1334
    %1351 = vmatprep.subr.mxu0 0.0
    %1352 = vmatpush1.msra.mxu0 %v1335
    %1353 = vmatprep.subr.mxu0 0.0
    %1354 = vmatpush1.msra.mxu0 %v1336
    %1355 = vmatprep.subr.mxu0 0.0
    %1356 = vmatpush1.msra.mxu0 0.0
    %1357 = vmatprep.subr.mxu0 0.0
    %1358 = vmatpush1.msra.mxu0 0.0
    %1359 = vmatprep.subr.mxu0 0.0
    %1360 = vmatpush1.msra.mxu0 0.0
    %1361 = vmatprep.subr.mxu0 0.0
    %1362 = vmatpush1.msra.mxu0 0.0
    %1363 = vmatprep.subr.mxu0 0.0
    %1364 = vmatpush1.msra.mxu0 0.0
    %1365 = vmatprep.subr.mxu0 0.0
    %1366 = vmatpush1.msra.mxu0 0.0
    %1367 = vmatprep.subr.mxu0 0.0
    %1368 = vmatpush1.msra.mxu0 0.0
    %1369 = vmatprep.subr.mxu0 0.0
    %1370 = vmatpush1.msra.mxu0 0.0
    %1371 = vmatprep.subr.mxu0 0.0
    %1372 = vmatpush1.msra.mxu0 0.0
    %1373 = vmatprep.subr.mxu0 0.0
    %1374 = vmatpush1.msra.mxu0 0.0
    %1375 = vmatprep.subr.mxu0 0.0
    %1376 = vmatpush1.msra.mxu0 0.0
    %1377 = vmatprep.subr.mxu0 0.0
    %1378 = vmatpush1.msra.mxu0 0.0
    %1379 = vmatprep.subr.mxu0 0.0
    %1380 = vmatpush1.msra.mxu0 0.0
    %1381 = vmatprep.subr.mxu0 0.0
    %1382 = vmatpush1.msra.mxu0 0.0
    %1383 = vmatprep.subr.mxu0 0.0
    %1384 = vmatpush1.msra.mxu0 0.0
    %1385 = vmatprep.subr.mxu0 0.0
    %1386 = vmatpush1.msra.mxu0 0.0
    %1387 = vmatprep.subr.mxu0 0.0
    %1388 = vmatpush1.msra.mxu0 0.0
    %1389 = vmatprep.subr.mxu0 0.0
    %1390 = vmatpush1.msra.mxu0 0.0
    %1391 = vmatprep.subr.mxu0 0.0
    %1392 = vmatpush1.msra.mxu0 0.0
    %1393 = vmatprep.subr.mxu0 0.0
    %1394 = vmatpush1.msra.mxu0 0.0
    %1395 = vmatprep.subr.mxu0 0.0
    %1396 = vmatpush1.msra.mxu0 0.0
    %1397 = vmatprep.subr.mxu0 0.0
    %1398 = vmatpush1.msra.mxu0 0.0
    %1399 = vmatprep.subr.mxu0 0.0
    %1400 = vmatpush1.msra.mxu0 0.0
    %1401 = vmatprep.subr.mxu0 0.0
    %1402 = vmatpush1.msra.mxu0 0.0
    %1403 = vmatprep.subr.mxu0 0.0
    %1404 = vmatpush1.msra.mxu0 0.0
    %1405 = vmatprep.subr.mxu0 0.0
    %1406 = vmatpush1.msra.mxu0 0.0
    %1407 = vmatprep.subr.mxu0 0.0
    %1408 = vmatpush1.msra.mxu0 0.0
    %1409 = vmatprep.subr.mxu0 0.0
    %1410 = vmatpush1.msra.mxu0 0.0
    %1411 = vmatprep.mubr.f32.mxu0 0.0
    %1412 = vmatmul.mubr.f32.gmra.mrb[0].mxu0 %v1345
    %v1413 = vpop.f32.mrb[0].mxu0
    %v1414 = vadd.f32 %v1342, %v1413
    %v1415 = vpop.f32.mrb[0].mxu0
    %1416 = vdwg.mxu0
    %v1417 = vmax.f32 %v1414, 0.0
    %v1418 = vld [vmem:[%s5] sm:$0xff]
    %v1419 = vld [vmem:[%s5 + $0x8] sm:$0xff]
    %v1420 = vld [vmem:[%s5 + $0x10] sm:$0xff]
    %v1421 = vld [vmem:[%s5 + $0x18] sm:$0xff]
    %v1422 = vld [vmem:[#allocation3] sm:$0x1]
    %v1424 = vlaneseq
    %v1425 = vshrl.u32 %v1424, 7
    %v1426 = vsub.s32 0, %v1425
    %v1427 = vrot.slane %v1422, %v1426
    %v1430 = vsel %vm252, %v1417, 0
    %1432 = vmatprep.subr.mxu0 0.0
    %1433 = vmatpush1.msra.mxu0 %v1418
    %1434 = vmatprep.subr.mxu0 0.0
    %1435 = vmatpush1.msra.mxu0 %v1419
    %1436 = vmatprep.subr.mxu0 0.0
    %1437 = vmatpush1.msra.mxu0 %v1420
    %1438 = vmatprep.subr.mxu0 0.0
    %1439 = vmatpush1.msra.mxu0 %v1421
    %1440 = vmatprep.subr.mxu0 0.0
    %1441 = vmatpush1.msra.mxu0 0.0
    %1442 = vmatprep.subr.mxu0 0.0
    %1443 = vmatpush1.msra.mxu0 0.0
    %1444 = vmatprep.subr.mxu0 0.0
    %1445 = vmatpush1.msra.mxu0 0.0
    %1446 = vmatprep.subr.mxu0 0.0
    %1447 = vmatpush1.msra.mxu0 0.0
    %1448 = vmatprep.subr.mxu0 0.0
    %1449 = vmatpush1.msra.mxu0 0.0
    %1450 = vmatprep.subr.mxu0 0.0
    %1451 = vmatpush1.msra.mxu0 0.0
    %1452 = vmatprep.subr.mxu0 0.0
    %1453 = vmatpush1.msra.mxu0 0.0
    %1454 = vmatprep.subr.mxu0 0.0
    %1455 = vmatpush1.msra.mxu0 0.0
    %1456 = vmatprep.subr.mxu0 0.0
    %1457 = vmatpush1.msra.mxu0 0.0
    %1458 = vmatprep.subr.mxu0 0.0
    %1459 = vmatpush1.msra.mxu0 0.0
    %1460 = vmatprep.subr.mxu0 0.0
    %1461 = vmatpush1.msra.mxu0 0.0
    %1462 = vmatprep.subr.mxu0 0.0
    %1463 = vmatpush1.msra.mxu0 0.0
    %1464 = vmatprep.subr.mxu0 0.0
    %1465 = vmatpush1.msra.mxu0 0.0
    %1466 = vmatprep.subr.mxu0 0.0
    %1467 = vmatpush1.msra.mxu0 0.0
    %1468 = vmatprep.subr.mxu0 0.0
    %1469 = vmatpush1.msra.mxu0 0.0
    %1470 = vmatprep.subr.mxu0 0.0
    %1471 = vmatpush1.msra.mxu0 0.0
    %1472 = vmatprep.subr.mxu0 0.0
    %1473 = vmatpush1.msra.mxu0 0.0
    %1474 = vmatprep.subr.mxu0 0.0
    %1475 = vmatpush1.msra.mxu0 0.0
    %1476 = vmatprep.subr.mxu0 0.0
    %1477 = vmatpush1.msra.mxu0 0.0
    %1478 = vmatprep.subr.mxu0 0.0
    %1479 = vmatpush1.msra.mxu0 0.0
    %1480 = vmatprep.subr.mxu0 0.0
    %1481 = vmatpush1.msra.mxu0 0.0
    %1482 = vmatprep.subr.mxu0 0.0
    %1483 = vmatpush1.msra.mxu0 0.0
    %1484 = vmatprep.subr.mxu0 0.0
    %1485 = vmatpush1.msra.mxu0 0.0
    %1486 = vmatprep.subr.mxu0 0.0
    %1487 = vmatpush1.msra.mxu0 0.0
    %1488 = vmatprep.subr.mxu0 0.0
    %1489 = vmatpush1.msra.mxu0 0.0
    %1490 = vmatprep.subr.mxu0 0.0
    %1491 = vmatpush1.msra.mxu0 0.0
    %1492 = vmatprep.subr.mxu0 0.0
    %1493 = vmatpush1.msra.mxu0 0.0
    %1494 = vmatprep.subr.mxu0 0.0
    %1495 = vmatpush1.msra.mxu0 0.0
    %1496 = vmatprep.mubr.f32.mxu0 0.0
    %1497 = vmatmul.mubr.f32.gmra.mrb[0].mxu0 %v1430
    %v1498 = vpop.f32.mrb[0].mxu0
    %v1499 = vadd.f32 %v1427, %v1498
    %v1500 = vpop.f32.mrb[0].mxu0
    %1501 = vdwg.mxu0
    %v1502 = vlaneseq
    %v1503 = vshrl.u32 %v1502, 7
    %v1504 = vlaneseq
    %v1505 = vand.u32 %v1504, 127
    %vm1506 = vcmp.eq.s32.totalorder %v1503, %v1505
    %1508 = vset.pattern.permute.xlu0 0
    %1509 = vperm.xlu0 %1508, %v1499
    %v1510 = vpop.permute.xlu0 %1509
    %v1512 = vsel %vm1506, %v1510, 0.0
    %vm1513 = vcmask 64512
    %v1514 = vsel %vm1513, %v1512, 0.0
    %v1515 = vrot.slane %v1514, 4
    %v1516 = vadd.f32 %v1514, %v1515
    %v1517 = vrot.slane %v1516, 2
    %v1518 = vadd.f32 %v1516, %v1517
    %v1519 = vrot.slane %v1518, 1
    %v1520 = vadd.f32 %v1518, %v1519
    %vm1521 = vcmask 57344
    %1522 = vst.msk [vmem:[#allocation4] sm:$0x1] %vm1521, %v1520
    // Predicated region
    $region38: #{tpu_custom_call.1} parent=1 // pred_check
      _
    $region39: #{tpu_custom_call.1} parent=1 // pred_check_branch
      %1524 = sbr.rel (0) target = $region41
    $region40: #{tpu_custom_call.1} parent=1 // pred_region
      %s1526 = ssub.s32 16, 16
      %1527 = vsyncadd [#allocation5], %s1526
      %s1529 = sshll.u32 [#allocation4], 4
      %s1530 = int_to_ptr.vmem [resolvable:$true] %s1529
      %1532 = dma.vmem_to_hbm [thread:$0]  %s1530, 16, %s9, [#allocation5]
    $region41: #{tpu_custom_call.1} parent=1 // pred_fallthru
      _
    // Predicated region
    $region42: #{tpu_custom_call.1} parent=1 // pred_check
      _
    $region43: #{tpu_custom_call.1} parent=1 // pred_check_branch
      %1534 = sbr.rel (0) target = $region45
    $region44: #{tpu_custom_call.1} parent=1 // pred_region
      %1535 = dma.done [#allocation5], 16
    $region45: #{tpu_custom_call.1} parent=1 // pred_fallthru
      _
    %1536 = vsyncpa [#allocation5], 1

</llo_original>
